<compile_context>
chip_gen: v7x
topology: tpu7x:2x2x1
jax: 0.10.0
libtpu: 0.0.40
codegen_flags: <defaults>
</compile_context>

<pallas_src>
import functools

import jax
import jax.numpy as jnp
from jax import lax
from jax.experimental import pallas as pl
from jax.experimental.pallas import tpu as pltpu


def _round_up(x, m):
    return (x + m - 1) // m * m


def _lstm_fc_kernel(gx_ref, h0_ref, c0_ref,
                    whh_ref, fcw_ref, fcb_ref,
                    out_ref, hT_ref, cT_ref,
                    h_sc, c_sc,
                    *, hidden_pad, batch_pad, t_chunk, seq_len):
    chunk = pl.program_id(0)
    n_chunks = pl.num_programs(0)
    Hp = hidden_pad
    Bp = batch_pad

    @pl.when(chunk == 0)
    def _():
        h_sc[...] = h0_ref[...]
        c_sc[...] = c0_ref[...]

    # Trip count / unroll policy: static + unrolled when T is a multiple of t_chunk
    # (the common case), dynamic (non-unrolled) fallback only for partial chunks.
    if seq_len % t_chunk == 0:
        n_steps = t_chunk
        unroll = True if t_chunk <= 32 else 8
    else:
        n_steps = jnp.minimum(t_chunk, seq_len - chunk * t_chunk)
        unroll = False

    def step(s, carry):
        h, c = carry
        row = pl.multiple_of(s * Bp, 8)
        # gx already contains x_t @ W_ih^T + (b_ih + b_hh); only the recurrent dot
        # remains on the serial path.  whh_ref is read inside the loop so the MXU
        # RHS streams from VMEM (no whole-weight vreg hoist / spill).
        gates = gx_ref[pl.ds(row, Bp), :] + jnp.dot(
            h.astype(whh_ref.dtype), whh_ref[...],
            preferred_element_type=jnp.float32)
        # Lane-aligned gate slices (Hp multiple of 128); PyTorch order i, f, g, o.
        i_g = jax.nn.sigmoid(gates[:, 0 * Hp:1 * Hp])
        f_g = jax.nn.sigmoid(gates[:, 1 * Hp:2 * Hp])
        g_g = jnp.tanh(gates[:, 2 * Hp:3 * Hp])
        o_g = jax.nn.sigmoid(gates[:, 3 * Hp:4 * Hp])
        c_new = f_g * c + i_g * g_g
        h_new = o_g * jnp.tanh(c_new)
        return h_new, c_new

    h_new, c_new = lax.fori_loop(0, n_steps, step,
                                 (h_sc[...], c_sc[...]), unroll=unroll)
    h_sc[...] = h_new
    c_sc[...] = c_new

    # FC head fused into the last chunk; Op is lane-dense (multiple of 128).
    @pl.when(chunk == n_chunks - 1)
    def _():
        hT_ref[...] = h_new.astype(hT_ref.dtype)
        cT_ref[...] = c_new.astype(cT_ref.dtype)
        out_ref[...] = (jnp.dot(h_new.astype(fcw_ref.dtype), fcw_ref[...],
                                preferred_element_type=jnp.float32)
                        + fcb_ref[...]).astype(out_ref.dtype)


def _pad_gate_cols(w, H, Hp):
    """(rows, 4H) PyTorch gate layout [i|f|g|o] -> (rows, 4Hp), each gate zero-padded."""
    rows = w.shape[0]
    w4 = w.reshape(rows, 4, H)
    w4 = jnp.pad(w4, ((0, 0), (0, 0), (0, Hp - H)))
    return w4.reshape(rows, 4 * Hp)


def lstm_network_forward(x, hidden, params, *, t_chunk=32, weight_dtype=jnp.float32):
    """Pallas equivalent of LSTMNetwork.forward(x, hidden).

    x:       (B, T, I) float32
    hidden:  (h0, c0), each (1, B, H)   (PyTorch nn.LSTM convention)
    returns: (out, (hT, cT)) with out (B, O), hT/cT (1, B, H)

    weight_dtype: jnp.bfloat16 recommended on v6e/v7x (halves weight VMEM/DMA,
    native MXU rate); keep jnp.float32 when bit-level parity with f32 reference
    is required.  Gate elementwise math is always f32.
    """
    h0, c0 = hidden
    B, T, I = x.shape
    H = params["w_hh"].shape[1]
    O = params["fc_w"].shape[0]

    Bp = _round_up(max(B, 8), 8)       # sublane-dense batch
    Hp = _round_up(H, 128)             # lane-aligned hidden / gate width
    Op = _round_up(O, 128)             # lane-dense FC output (no masked stores)
    t_chunk = min(t_chunk, T)
    n_chunks = pl.cdiv(T, t_chunk)
    Tp = n_chunks * t_chunk

    # Weights pre-transposed to (in, out), gate-padded, zero-padded.
    w_ih_t = _pad_gate_cols(params["w_ih"].T, H, Hp)                     # (I, 4Hp) f32
    w_hh_t = _pad_gate_cols(params["w_hh"].T, H, Hp)                     # (H, 4Hp)
    w_hh_t = jnp.pad(w_hh_t, ((0, Hp - H), (0, 0))).astype(weight_dtype)  # (Hp, 4Hp)
    bias = _pad_gate_cols((params["b_ih"] + params["b_hh"]).reshape(1, 4 * H),
                          H, Hp)                                         # (1, 4Hp)
    fc_w_t = jnp.pad(params["fc_w"].T,
                     ((0, Hp - H), (0, Op - O))).astype(weight_dtype)    # (Hp, Op)
    fc_b = jnp.pad(params["fc_b"].reshape(1, O), ((0, 0), (0, Op - O)))  # (1, Op)

    # States: pad batch to Bp, hidden to Hp.
    h0_p = jnp.pad(h0.reshape(B, H), ((0, Bp - B), (0, Hp - H)))
    c0_p = jnp.pad(c0.reshape(B, H), ((0, Bp - B), (0, Hp - H)))

    # Input projection hoisted entirely out of the kernel: ONE lane-dense XLA matmul.
    # The kernel then streams (t_chunk*Bp, 4Hp) gx blocks through the auto-pipeline.
    x_tm = jnp.pad(jnp.transpose(x, (1, 0, 2)),
                   ((0, Tp - T), (0, Bp - B), (0, 0)))                   # (Tp, Bp, I)
    x2d = x_tm.reshape(Tp * Bp, I)
    gx = (jnp.dot(x2d, w_ih_t, preferred_element_type=jnp.float32)
          + bias).astype(jnp.float32)                                    # (Tp*Bp, 4Hp)

    # Explicit VMEM budget (sized from actual buffers, capped below physical VMEM).
    w_itm = jnp.dtype(weight_dtype).itemsize
    need = (2 * t_chunk * Bp * 4 * Hp * 4          # gx chunk, double-buffered
            + Hp * 4 * Hp * w_itm                  # W_hh^T (single-buffered)
            + Hp * Op * w_itm                      # fc_W^T (single-buffered)
            + 2 * Bp * Hp * 4                      # h0, c0
            + 8 * Op * 4                           # fc_b (sublane-padded)
            + 2 * (Bp * Op + 2 * Bp * Hp) * 4      # outputs (double-buffered)
            + 2 * Bp * Hp * 4)                     # h/c scratch
    try:
        phys_vmem = int(pltpu.get_tpu_info().vmem_capacity_bytes)
    except Exception:
        phys_vmem = 64 * 1024 * 1024               # conservative (v7x per-TC)
    vmem_limit = int(min(max(2 * need, 32 * 1024 * 1024), phys_vmem * 3 // 4))

    kernel = functools.partial(_lstm_fc_kernel, hidden_pad=Hp, batch_pad=Bp,
                               t_chunk=t_chunk, seq_len=T)

    const = lambda c: (0, 0)
    single = pl.Buffered(buffer_count=1)           # constants never change across chunks

    out_p, hT_p, cT_p = pl.pallas_call(
        kernel,
        out_shape=(
            jax.ShapeDtypeStruct((Bp, Op), jnp.float32),
            jax.ShapeDtypeStruct((Bp, Hp), jnp.float32),
            jax.ShapeDtypeStruct((Bp, Hp), jnp.float32),
        ),
        grid_spec=pltpu.PrefetchScalarGridSpec(
            num_scalar_prefetch=0,
            grid=(n_chunks,),
            in_specs=[
                pl.BlockSpec((t_chunk * Bp, 4 * Hp), lambda c: (c, 0)),   # gx chunk
                pl.BlockSpec((Bp, Hp), const, pipeline_mode=single),      # h0
                pl.BlockSpec((Bp, Hp), const, pipeline_mode=single),      # c0
                pl.BlockSpec((Hp, 4 * Hp), const, pipeline_mode=single),  # W_hh^T
                pl.BlockSpec((Hp, Op), const, pipeline_mode=single),      # fc W^T
                pl.BlockSpec((1, Op), const, pipeline_mode=single),       # fc b
            ],
            out_specs=[
                pl.BlockSpec((Bp, Op), const),
                pl.BlockSpec((Bp, Hp), const),
                pl.BlockSpec((Bp, Hp), const),
            ],
            scratch_shapes=[
                pltpu.VMEM((Bp, Hp), jnp.float32),   # h carry
                pltpu.VMEM((Bp, Hp), jnp.float32),   # c carry
            ],
        ),
        compiler_params=pltpu.CompilerParams(
            dimension_semantics=("arbitrary",),      # time chunks are sequential
            vmem_limit_bytes=vmem_limit),
    )(gx, h0_p, c0_p, w_hh_t, fc_w_t, fc_b)

    out = out_p[:B, :O]
    hT = hT_p[:B, :H].reshape(1, B, H)
    cT = cT_p[:B, :H].reshape(1, B, H)
    return out, (hT, cT)


def _reference_forward(x, hidden, params):
    """Pure-JAX reference mirroring torch.nn.LSTM(batch_first=True) + Linear."""
    h = hidden[0][0]
    c = hidden[1][0]
    H = params["w_hh"].shape[1]
    w_ih_t = params["w_ih"].T
    w_hh_t = params["w_hh"].T
    b = params["b_ih"] + params["b_hh"]

    def step(carry, x_t):
        h, c = carry
        gates = x_t @ w_ih_t + h @ w_hh_t + b
        i = jax.nn.sigmoid(gates[:, 0 * H:1 * H])
        f = jax.nn.sigmoid(gates[:, 1 * H:2 * H])
        g = jnp.tanh(gates[:, 2 * H:3 * H])
        o = jax.nn.sigmoid(gates[:, 3 * H:4 * H])
        c = f * c + i * g
        h = o * jnp.tanh(c)
        return (h, c), h

    (h, c), _ = jax.lax.scan(step, (h, c), jnp.swapaxes(x, 0, 1))
    out = h @ params["fc_w"].T + params["fc_b"]
    return out, (h[None], c[None])


def init_params(key, input_size, hidden_size, output_size):
    """Deterministic init matching the PyTorch module's parameter shapes."""
    ks = jax.random.split(key, 6)
    k_lstm = 1.0 / jnp.sqrt(hidden_size)
    k_fc = 1.0 / jnp.sqrt(hidden_size)
    u = lambda k, shape, s: jax.random.uniform(k, shape, jnp.float32, -s, s)
    return {
        "w_ih": u(ks[0], (4 * hidden_size, input_size), k_lstm),
        "w_hh": u(ks[1], (4 * hidden_size, hidden_size), k_lstm),
        "b_ih": u(ks[2], (4 * hidden_size,), k_lstm),
        "b_hh": u(ks[3], (4 * hidden_size,), k_lstm),
        "fc_w": u(ks[4], (output_size, hidden_size), k_fc),
        "fc_b": u(ks[5], (output_size,), k_fc),
    }


if __name__ == "__main__":
    B, T, I, H, O = 2, 8, 4, 32, 3

    key = jax.random.PRNGKey(0)
    k_params, k_x = jax.random.split(key)
    params = init_params(k_params, I, H, O)
    x = jax.random.normal(k_x, (B, T, I), dtype=jnp.float32)

    # init_hidden(batch_size): zeros of shape (1, B, H) for both h0 and c0.
    hidden = (jnp.zeros((1, B, H), jnp.float32), jnp.zeros((1, B, H), jnp.float32))

    out, (hT, cT) = lstm_network_forward(x, hidden, params)
    jax.block_until_ready((out, hT, cT))

    ref_out, (ref_h, ref_c) = _reference_forward(x, hidden, params)
    assert jnp.allclose(out, ref_out, atol=1e-4, rtol=1e-4)
    assert jnp.allclose(hT, ref_h, atol=1e-4, rtol=1e-4)
    assert jnp.allclose(cT, ref_c, atol=1e-4, rtol=1e-4)

    print("KERNEL_OK")
</pallas_src>

<mosaic_0001>
module attributes {stable_mosaic.version = 11 : i64} {
  func.func @_lstm_fc_kernel(%arg0: i32, %arg1: memref<64x512xf32, #tpu.memory_space<vmem>>, %arg2: memref<8x128xf32, #tpu.memory_space<vmem>>, %arg3: memref<8x128xf32, #tpu.memory_space<vmem>>, %arg4: memref<128x512xf32, #tpu.memory_space<vmem>>, %arg5: memref<128x128xf32, #tpu.memory_space<vmem>>, %arg6: memref<1x128xf32, #tpu.memory_space<vmem>>, %arg7: memref<8x128xf32, #tpu.memory_space<vmem>>, %arg8: memref<8x128xf32, #tpu.memory_space<vmem>>, %arg9: memref<8x128xf32, #tpu.memory_space<vmem>>, %arg10: memref<8x128xf32, #tpu.memory_space<vmem>>, %arg11: memref<8x128xf32, #tpu.memory_space<vmem>>) attributes {dimension_semantics = [#tpu.dimension_semantics<arbitrary>], iteration_bounds = array<i64: 1>, scalar_prefetch = 0 : i64, scratch_operands = 2 : i64, tpu.core_type = #tpu.core_type<tc>, window_params = [{transform_indices = @transform_0, window_bounds = array<i64: 64, 512>}, {pipeline_mode = #tpu.pipeline_mode<synchronous>, transform_indices = @transform_1, window_bounds = array<i64: 8, 128>}, {pipeline_mode = #tpu.pipeline_mode<synchronous>, transform_indices = @transform_2, window_bounds = array<i64: 8, 128>}, {pipeline_mode = #tpu.pipeline_mode<synchronous>, transform_indices = @transform_3, window_bounds = array<i64: 128, 512>}, {pipeline_mode = #tpu.pipeline_mode<synchronous>, transform_indices = @transform_4, window_bounds = array<i64: 128, 128>}, {pipeline_mode = #tpu.pipeline_mode<synchronous>, transform_indices = @transform_5, window_bounds = array<i64: 1, 128>}, {pipeline_mode = #tpu.pipeline_mode<synchronous>, transform_indices = @transform_6, window_bounds = array<i64: 8, 128>}, {pipeline_mode = #tpu.pipeline_mode<synchronous>, transform_indices = @transform_7, window_bounds = array<i64: 8, 128>}, {pipeline_mode = #tpu.pipeline_mode<synchronous>, transform_indices = @transform_8, window_bounds = array<i64: 8, 128>}]} {
    %c0_i32 = arith.constant 0 : i32
    %0 = arith.cmpi eq, %arg0, %c0_i32 : i32
    %1 = arith.extui %0 : i1 to i32
    %c0_i32_0 = arith.constant 0 : i32
    %2 = arith.cmpi ne, %1, %c0_i32_0 : i32
    scf.if %2 {
      %c0_74 = arith.constant 0 : index
      %c0_75 = arith.constant 0 : index
      %266 = vector.load %arg2[%c0_74, %c0_75] : memref<8x128xf32, #tpu.memory_space<vmem>>, vector<8x128xf32>
      %c0_76 = arith.constant 0 : index
      %c0_77 = arith.constant 0 : index
      %267 = vector.load %arg10[%c0_76, %c0_77] : memref<8x128xf32, #tpu.memory_space<vmem>>, vector<8x128xf32>
      tpu.vector_store %arg10[%c0_76, %c0_77], %266 {strides = array<i32>} : memref<8x128xf32, #tpu.memory_space<vmem>>, vector<8x128xf32>,
      %c0_78 = arith.constant 0 : index
      %c0_79 = arith.constant 0 : index
      %268 = vector.load %arg3[%c0_78, %c0_79] : memref<8x128xf32, #tpu.memory_space<vmem>>, vector<8x128xf32>
      %c0_80 = arith.constant 0 : index
      %c0_81 = arith.constant 0 : index
      %269 = vector.load %arg11[%c0_80, %c0_81] : memref<8x128xf32, #tpu.memory_space<vmem>>, vector<8x128xf32>
      tpu.vector_store %arg11[%c0_80, %c0_81], %268 {strides = array<i32>} : memref<8x128xf32, #tpu.memory_space<vmem>>, vector<8x128xf32>,
    } else {
    }
    %c0 = arith.constant 0 : index
    %c0_1 = arith.constant 0 : index
    %3 = vector.load %arg10[%c0, %c0_1] : memref<8x128xf32, #tpu.memory_space<vmem>>, vector<8x128xf32>
    %c0_2 = arith.constant 0 : index
    %c0_3 = arith.constant 0 : index
    %4 = vector.load %arg11[%c0_2, %c0_3] : memref<8x128xf32, #tpu.memory_space<vmem>>, vector<8x128xf32>
    %c0_i32_4 = arith.constant 0 : i32
    %c8_i32 = arith.constant 8 : i32
    %5 = arith.muli %c0_i32_4, %c8_i32 : i32
    %6 = tpu.assume_multiple %5, 8 : i32
    %7 = arith.index_cast %6 : i32 to index
    %c0_5 = arith.constant 0 : index
    %8 = vector.load %arg1[%7, %c0_5] : memref<64x512xf32, #tpu.memory_space<vmem>>, vector<8x512xf32>
    %c0_6 = arith.constant 0 : index
    %c0_7 = arith.constant 0 : index
    %9 = vector.load %arg4[%c0_6, %c0_7] : memref<128x512xf32, #tpu.memory_space<vmem>>, vector<128x512xf32>
    %cst = arith.constant dense<0.000000e+00> : vector<8x512xf32>
    %10 = tpu.matmul %3, %9, %cst {dimension_numbers = #tpu.dot_dimension_numbers<[1], [0], [0], [1], [0, 0, 1, 1], [], []>} : vector<8x128xf32>, vector<128x512xf32>, vector<8x512xf32> -> vector<8x512xf32>
    %11 = arith.addf %8, %10 : vector<8x512xf32>
    %12 = vector.extract_strided_slice %11 {offsets = [0, 0], sizes = [8, 128], strides = [1, 1]} : vector<8x512xf32> to vector<8x128xf32>
    %13 = arith.negf %12 : vector<8x128xf32>
    %14 = math.exp %13 : vector<8x128xf32>
    %cst_8 = arith.constant 1.000000e+00 : f32
    %15 = vector.broadcast %cst_8 : f32 to vector<8x128xf32>
    %16 = arith.addf %15, %14 : vector<8x128xf32>
    %17 = arith.divf %15, %16 : vector<8x128xf32>
    %18 = vector.extract_strided_slice %11 {offsets = [0, 128], sizes = [8, 128], strides = [1, 1]} : vector<8x512xf32> to vector<8x128xf32>
    %19 = arith.negf %18 : vector<8x128xf32>
    %20 = math.exp %19 : vector<8x128xf32>
    %cst_9 = arith.constant 1.000000e+00 : f32
    %21 = vector.broadcast %cst_9 : f32 to vector<8x128xf32>
    %22 = arith.addf %21, %20 : vector<8x128xf32>
    %23 = arith.divf %21, %22 : vector<8x128xf32>
    %24 = vector.extract_strided_slice %11 {offsets = [0, 256], sizes = [8, 128], strides = [1, 1]} : vector<8x512xf32> to vector<8x128xf32>
    %25 = math.tanh %24 : vector<8x128xf32>
    %26 = vector.extract_strided_slice %11 {offsets = [0, 384], sizes = [8, 128], strides = [1, 1]} : vector<8x512xf32> to vector<8x128xf32>
    %27 = arith.negf %26 : vector<8x128xf32>
    %28 = math.exp %27 : vector<8x128xf32>
    %cst_10 = arith.constant 1.000000e+00 : f32
    %29 = vector.broadcast %cst_10 : f32 to vector<8x128xf32>
    %30 = arith.addf %29, %28 : vector<8x128xf32>
    %31 = arith.divf %29, %30 : vector<8x128xf32>
    %32 = arith.mulf %23, %4 : vector<8x128xf32>
    %33 = arith.mulf %17, %25 : vector<8x128xf32>
    %34 = arith.addf %32, %33 : vector<8x128xf32>
    %35 = math.tanh %34 : vector<8x128xf32>
    %36 = arith.mulf %31, %35 : vector<8x128xf32>
    %c1_i32 = arith.constant 1 : i32
    %c8_i32_11 = arith.constant 8 : i32
    %37 = arith.muli %c1_i32, %c8_i32_11 : i32
    %38 = tpu.assume_multiple %37, 8 : i32
    %39 = arith.index_cast %38 : i32 to index
    %c0_12 = arith.constant 0 : index
    %40 = vector.load %arg1[%39, %c0_12] : memref<64x512xf32, #tpu.memory_space<vmem>>, vector<8x512xf32>
    %c0_13 = arith.constant 0 : index
    %c0_14 = arith.constant 0 : index
    %41 = vector.load %arg4[%c0_13, %c0_14] : memref<128x512xf32, #tpu.memory_space<vmem>>, vector<128x512xf32>
    %cst_15 = arith.constant dense<0.000000e+00> : vector<8x512xf32>
    %42 = tpu.matmul %36, %41, %cst_15 {dimension_numbers = #tpu.dot_dimension_numbers<[1], [0], [0], [1], [0, 0, 1, 1], [], []>} : vector<8x128xf32>, vector<128x512xf32>, vector<8x512xf32> -> vector<8x512xf32>
    %43 = arith.addf %40, %42 : vector<8x512xf32>
    %44 = vector.extract_strided_slice %43 {offsets = [0, 0], sizes = [8, 128], strides = [1, 1]} : vector<8x512xf32> to vector<8x128xf32>
    %45 = arith.negf %44 : vector<8x128xf32>
    %46 = math.exp %45 : vector<8x128xf32>
    %cst_16 = arith.constant 1.000000e+00 : f32
    %47 = vector.broadcast %cst_16 : f32 to vector<8x128xf32>
    %48 = arith.addf %47, %46 : vector<8x128xf32>
    %49 = arith.divf %47, %48 : vector<8x128xf32>
    %50 = vector.extract_strided_slice %43 {offsets = [0, 128], sizes = [8, 128], strides = [1, 1]} : vector<8x512xf32> to vector<8x128xf32>
    %51 = arith.negf %50 : vector<8x128xf32>
    %52 = math.exp %51 : vector<8x128xf32>
    %cst_17 = arith.constant 1.000000e+00 : f32
    %53 = vector.broadcast %cst_17 : f32 to vector<8x128xf32>
    %54 = arith.addf %53, %52 : vector<8x128xf32>
    %55 = arith.divf %53, %54 : vector<8x128xf32>
    %56 = vector.extract_strided_slice %43 {offsets = [0, 256], sizes = [8, 128], strides = [1, 1]} : vector<8x512xf32> to vector<8x128xf32>
    %57 = math.tanh %56 : vector<8x128xf32>
    %58 = vector.extract_strided_slice %43 {offsets = [0, 384], sizes = [8, 128], strides = [1, 1]} : vector<8x512xf32> to vector<8x128xf32>
    %59 = arith.negf %58 : vector<8x128xf32>
    %60 = math.exp %59 : vector<8x128xf32>
    %cst_18 = arith.constant 1.000000e+00 : f32
    %61 = vector.broadcast %cst_18 : f32 to vector<8x128xf32>
    %62 = arith.addf %61, %60 : vector<8x128xf32>
    %63 = arith.divf %61, %62 : vector<8x128xf32>
    %64 = arith.mulf %55, %34 : vector<8x128xf32>
    %65 = arith.mulf %49, %57 : vector<8x128xf32>
    %66 = arith.addf %64, %65 : vector<8x128xf32>
    %67 = math.tanh %66 : vector<8x128xf32>
    %68 = arith.mulf %63, %67 : vector<8x128xf32>
    %c2_i32 = arith.constant 2 : i32
    %c8_i32_19 = arith.constant 8 : i32
    %69 = arith.muli %c2_i32, %c8_i32_19 : i32
    %70 = tpu.assume_multiple %69, 8 : i32
    %71 = arith.index_cast %70 : i32 to index
    %c0_20 = arith.constant 0 : index
    %72 = vector.load %arg1[%71, %c0_20] : memref<64x512xf32, #tpu.memory_space<vmem>>, vector<8x512xf32>
    %c0_21 = arith.constant 0 : index
    %c0_22 = arith.constant 0 : index
    %73 = vector.load %arg4[%c0_21, %c0_22] : memref<128x512xf32, #tpu.memory_space<vmem>>, vector<128x512xf32>
    %cst_23 = arith.constant dense<0.000000e+00> : vector<8x512xf32>
    %74 = tpu.matmul %68, %73, %cst_23 {dimension_numbers = #tpu.dot_dimension_numbers<[1], [0], [0], [1], [0, 0, 1, 1], [], []>} : vector<8x128xf32>, vector<128x512xf32>, vector<8x512xf32> -> vector<8x512xf32>
    %75 = arith.addf %72, %74 : vector<8x512xf32>
    %76 = vector.extract_strided_slice %75 {offsets = [0, 0], sizes = [8, 128], strides = [1, 1]} : vector<8x512xf32> to vector<8x128xf32>
    %77 = arith.negf %76 : vector<8x128xf32>
    %78 = math.exp %77 : vector<8x128xf32>
    %cst_24 = arith.constant 1.000000e+00 : f32
    %79 = vector.broadcast %cst_24 : f32 to vector<8x128xf32>
    %80 = arith.addf %79, %78 : vector<8x128xf32>
    %81 = arith.divf %79, %80 : vector<8x128xf32>
    %82 = vector.extract_strided_slice %75 {offsets = [0, 128], sizes = [8, 128], strides = [1, 1]} : vector<8x512xf32> to vector<8x128xf32>
    %83 = arith.negf %82 : vector<8x128xf32>
    %84 = math.exp %83 : vector<8x128xf32>
    %cst_25 = arith.constant 1.000000e+00 : f32
    %85 = vector.broadcast %cst_25 : f32 to vector<8x128xf32>
    %86 = arith.addf %85, %84 : vector<8x128xf32>
    %87 = arith.divf %85, %86 : vector<8x128xf32>
    %88 = vector.extract_strided_slice %75 {offsets = [0, 256], sizes = [8, 128], strides = [1, 1]} : vector<8x512xf32> to vector<8x128xf32>
    %89 = math.tanh %88 : vector<8x128xf32>
    %90 = vector.extract_strided_slice %75 {offsets = [0, 384], sizes = [8, 128], strides = [1, 1]} : vector<8x512xf32> to vector<8x128xf32>
    %91 = arith.negf %90 : vector<8x128xf32>
    %92 = math.exp %91 : vector<8x128xf32>
    %cst_26 = arith.constant 1.000000e+00 : f32
    %93 = vector.broadcast %cst_26 : f32 to vector<8x128xf32>
    %94 = arith.addf %93, %92 : vector<8x128xf32>
    %95 = arith.divf %93, %94 : vector<8x128xf32>
    %96 = arith.mulf %87, %66 : vector<8x128xf32>
    %97 = arith.mulf %81, %89 : vector<8x128xf32>
    %98 = arith.addf %96, %97 : vector<8x128xf32>
    %99 = math.tanh %98 : vector<8x128xf32>
    %100 = arith.mulf %95, %99 : vector<8x128xf32>
    %c3_i32 = arith.constant 3 : i32
    %c8_i32_27 = arith.constant 8 : i32
    %101 = arith.muli %c3_i32, %c8_i32_27 : i32
    %102 = tpu.assume_multiple %101, 8 : i32
    %103 = arith.index_cast %102 : i32 to index
    %c0_28 = arith.constant 0 : index
    %104 = vector.load %arg1[%103, %c0_28] : memref<64x512xf32, #tpu.memory_space<vmem>>, vector<8x512xf32>
    %c0_29 = arith.constant 0 : index
    %c0_30 = arith.constant 0 : index
    %105 = vector.load %arg4[%c0_29, %c0_30] : memref<128x512xf32, #tpu.memory_space<vmem>>, vector<128x512xf32>
    %cst_31 = arith.constant dense<0.000000e+00> : vector<8x512xf32>
    %106 = tpu.matmul %100, %105, %cst_31 {dimension_numbers = #tpu.dot_dimension_numbers<[1], [0], [0], [1], [0, 0, 1, 1], [], []>} : vector<8x128xf32>, vector<128x512xf32>, vector<8x512xf32> -> vector<8x512xf32>
    %107 = arith.addf %104, %106 : vector<8x512xf32>
    %108 = vector.extract_strided_slice %107 {offsets = [0, 0], sizes = [8, 128], strides = [1, 1]} : vector<8x512xf32> to vector<8x128xf32>
    %109 = arith.negf %108 : vector<8x128xf32>
    %110 = math.exp %109 : vector<8x128xf32>
    %cst_32 = arith.constant 1.000000e+00 : f32
    %111 = vector.broadcast %cst_32 : f32 to vector<8x128xf32>
    %112 = arith.addf %111, %110 : vector<8x128xf32>
    %113 = arith.divf %111, %112 : vector<8x128xf32>
    %114 = vector.extract_strided_slice %107 {offsets = [0, 128], sizes = [8, 128], strides = [1, 1]} : vector<8x512xf32> to vector<8x128xf32>
    %115 = arith.negf %114 : vector<8x128xf32>
    %116 = math.exp %115 : vector<8x128xf32>
    %cst_33 = arith.constant 1.000000e+00 : f32
    %117 = vector.broadcast %cst_33 : f32 to vector<8x128xf32>
    %118 = arith.addf %117, %116 : vector<8x128xf32>
    %119 = arith.divf %117, %118 : vector<8x128xf32>
    %120 = vector.extract_strided_slice %107 {offsets = [0, 256], sizes = [8, 128], strides = [1, 1]} : vector<8x512xf32> to vector<8x128xf32>
    %121 = math.tanh %120 : vector<8x128xf32>
    %122 = vector.extract_strided_slice %107 {offsets = [0, 384], sizes = [8, 128], strides = [1, 1]} : vector<8x512xf32> to vector<8x128xf32>
    %123 = arith.negf %122 : vector<8x128xf32>
    %124 = math.exp %123 : vector<8x128xf32>
    %cst_34 = arith.constant 1.000000e+00 : f32
    %125 = vector.broadcast %cst_34 : f32 to vector<8x128xf32>
    %126 = arith.addf %125, %124 : vector<8x128xf32>
    %127 = arith.divf %125, %126 : vector<8x128xf32>
    %128 = arith.mulf %119, %98 : vector<8x128xf32>
    %129 = arith.mulf %113, %121 : vector<8x128xf32>
    %130 = arith.addf %128, %129 : vector<8x128xf32>
    %131 = math.tanh %130 : vector<8x128xf32>
    %132 = arith.mulf %127, %131 : vector<8x128xf32>
    %c4_i32 = arith.constant 4 : i32
    %c8_i32_35 = arith.constant 8 : i32
    %133 = arith.muli %c4_i32, %c8_i32_35 : i32
    %134 = tpu.assume_multiple %133, 8 : i32
    %135 = arith.index_cast %134 : i32 to index
    %c0_36 = arith.constant 0 : index
    %136 = vector.load %arg1[%135, %c0_36] : memref<64x512xf32, #tpu.memory_space<vmem>>, vector<8x512xf32>
    %c0_37 = arith.constant 0 : index
    %c0_38 = arith.constant 0 : index
    %137 = vector.load %arg4[%c0_37, %c0_38] : memref<128x512xf32, #tpu.memory_space<vmem>>, vector<128x512xf32>
    %cst_39 = arith.constant dense<0.000000e+00> : vector<8x512xf32>
    %138 = tpu.matmul %132, %137, %cst_39 {dimension_numbers = #tpu.dot_dimension_numbers<[1], [0], [0], [1], [0, 0, 1, 1], [], []>} : vector<8x128xf32>, vector<128x512xf32>, vector<8x512xf32> -> vector<8x512xf32>
    %139 = arith.addf %136, %138 : vector<8x512xf32>
    %140 = vector.extract_strided_slice %139 {offsets = [0, 0], sizes = [8, 128], strides = [1, 1]} : vector<8x512xf32> to vector<8x128xf32>
    %141 = arith.negf %140 : vector<8x128xf32>
    %142 = math.exp %141 : vector<8x128xf32>
    %cst_40 = arith.constant 1.000000e+00 : f32
    %143 = vector.broadcast %cst_40 : f32 to vector<8x128xf32>
    %144 = arith.addf %143, %142 : vector<8x128xf32>
    %145 = arith.divf %143, %144 : vector<8x128xf32>
    %146 = vector.extract_strided_slice %139 {offsets = [0, 128], sizes = [8, 128], strides = [1, 1]} : vector<8x512xf32> to vector<8x128xf32>
    %147 = arith.negf %146 : vector<8x128xf32>
    %148 = math.exp %147 : vector<8x128xf32>
    %cst_41 = arith.constant 1.000000e+00 : f32
    %149 = vector.broadcast %cst_41 : f32 to vector<8x128xf32>
    %150 = arith.addf %149, %148 : vector<8x128xf32>
    %151 = arith.divf %149, %150 : vector<8x128xf32>
    %152 = vector.extract_strided_slice %139 {offsets = [0, 256], sizes = [8, 128], strides = [1, 1]} : vector<8x512xf32> to vector<8x128xf32>
    %153 = math.tanh %152 : vector<8x128xf32>
    %154 = vector.extract_strided_slice %139 {offsets = [0, 384], sizes = [8, 128], strides = [1, 1]} : vector<8x512xf32> to vector<8x128xf32>
    %155 = arith.negf %154 : vector<8x128xf32>
    %156 = math.exp %155 : vector<8x128xf32>
    %cst_42 = arith.constant 1.000000e+00 : f32
    %157 = vector.broadcast %cst_42 : f32 to vector<8x128xf32>
    %158 = arith.addf %157, %156 : vector<8x128xf32>
    %159 = arith.divf %157, %158 : vector<8x128xf32>
    %160 = arith.mulf %151, %130 : vector<8x128xf32>
    %161 = arith.mulf %145, %153 : vector<8x128xf32>
    %162 = arith.addf %160, %161 : vector<8x128xf32>
    %163 = math.tanh %162 : vector<8x128xf32>
    %164 = arith.mulf %159, %163 : vector<8x128xf32>
    %c5_i32 = arith.constant 5 : i32
    %c8_i32_43 = arith.constant 8 : i32
    %165 = arith.muli %c5_i32, %c8_i32_43 : i32
    %166 = tpu.assume_multiple %165, 8 : i32
    %167 = arith.index_cast %166 : i32 to index
    %c0_44 = arith.constant 0 : index
    %168 = vector.load %arg1[%167, %c0_44] : memref<64x512xf32, #tpu.memory_space<vmem>>, vector<8x512xf32>
    %c0_45 = arith.constant 0 : index
    %c0_46 = arith.constant 0 : index
    %169 = vector.load %arg4[%c0_45, %c0_46] : memref<128x512xf32, #tpu.memory_space<vmem>>, vector<128x512xf32>
    %cst_47 = arith.constant dense<0.000000e+00> : vector<8x512xf32>
    %170 = tpu.matmul %164, %169, %cst_47 {dimension_numbers = #tpu.dot_dimension_numbers<[1], [0], [0], [1], [0, 0, 1, 1], [], []>} : vector<8x128xf32>, vector<128x512xf32>, vector<8x512xf32> -> vector<8x512xf32>
    %171 = arith.addf %168, %170 : vector<8x512xf32>
    %172 = vector.extract_strided_slice %171 {offsets = [0, 0], sizes = [8, 128], strides = [1, 1]} : vector<8x512xf32> to vector<8x128xf32>
    %173 = arith.negf %172 : vector<8x128xf32>
    %174 = math.exp %173 : vector<8x128xf32>
    %cst_48 = arith.constant 1.000000e+00 : f32
    %175 = vector.broadcast %cst_48 : f32 to vector<8x128xf32>
    %176 = arith.addf %175, %174 : vector<8x128xf32>
    %177 = arith.divf %175, %176 : vector<8x128xf32>
    %178 = vector.extract_strided_slice %171 {offsets = [0, 128], sizes = [8, 128], strides = [1, 1]} : vector<8x512xf32> to vector<8x128xf32>
    %179 = arith.negf %178 : vector<8x128xf32>
    %180 = math.exp %179 : vector<8x128xf32>
    %cst_49 = arith.constant 1.000000e+00 : f32
    %181 = vector.broadcast %cst_49 : f32 to vector<8x128xf32>
    %182 = arith.addf %181, %180 : vector<8x128xf32>
    %183 = arith.divf %181, %182 : vector<8x128xf32>
    %184 = vector.extract_strided_slice %171 {offsets = [0, 256], sizes = [8, 128], strides = [1, 1]} : vector<8x512xf32> to vector<8x128xf32>
    %185 = math.tanh %184 : vector<8x128xf32>
    %186 = vector.extract_strided_slice %171 {offsets = [0, 384], sizes = [8, 128], strides = [1, 1]} : vector<8x512xf32> to vector<8x128xf32>
    %187 = arith.negf %186 : vector<8x128xf32>
    %188 = math.exp %187 : vector<8x128xf32>
    %cst_50 = arith.constant 1.000000e+00 : f32
    %189 = vector.broadcast %cst_50 : f32 to vector<8x128xf32>
    %190 = arith.addf %189, %188 : vector<8x128xf32>
    %191 = arith.divf %189, %190 : vector<8x128xf32>
    %192 = arith.mulf %183, %162 : vector<8x128xf32>
    %193 = arith.mulf %177, %185 : vector<8x128xf32>
    %194 = arith.addf %192, %193 : vector<8x128xf32>
    %195 = math.tanh %194 : vector<8x128xf32>
    %196 = arith.mulf %191, %195 : vector<8x128xf32>
    %c6_i32 = arith.constant 6 : i32
    %c8_i32_51 = arith.constant 8 : i32
    %197 = arith.muli %c6_i32, %c8_i32_51 : i32
    %198 = tpu.assume_multiple %197, 8 : i32
    %199 = arith.index_cast %198 : i32 to index
    %c0_52 = arith.constant 0 : index
    %200 = vector.load %arg1[%199, %c0_52] : memref<64x512xf32, #tpu.memory_space<vmem>>, vector<8x512xf32>
    %c0_53 = arith.constant 0 : index
    %c0_54 = arith.constant 0 : index
    %201 = vector.load %arg4[%c0_53, %c0_54] : memref<128x512xf32, #tpu.memory_space<vmem>>, vector<128x512xf32>
    %cst_55 = arith.constant dense<0.000000e+00> : vector<8x512xf32>
    %202 = tpu.matmul %196, %201, %cst_55 {dimension_numbers = #tpu.dot_dimension_numbers<[1], [0], [0], [1], [0, 0, 1, 1], [], []>} : vector<8x128xf32>, vector<128x512xf32>, vector<8x512xf32> -> vector<8x512xf32>
    %203 = arith.addf %200, %202 : vector<8x512xf32>
    %204 = vector.extract_strided_slice %203 {offsets = [0, 0], sizes = [8, 128], strides = [1, 1]} : vector<8x512xf32> to vector<8x128xf32>
    %205 = arith.negf %204 : vector<8x128xf32>
    %206 = math.exp %205 : vector<8x128xf32>
    %cst_56 = arith.constant 1.000000e+00 : f32
    %207 = vector.broadcast %cst_56 : f32 to vector<8x128xf32>
    %208 = arith.addf %207, %206 : vector<8x128xf32>
    %209 = arith.divf %207, %208 : vector<8x128xf32>
    %210 = vector.extract_strided_slice %203 {offsets = [0, 128], sizes = [8, 128], strides = [1, 1]} : vector<8x512xf32> to vector<8x128xf32>
    %211 = arith.negf %210 : vector<8x128xf32>
    %212 = math.exp %211 : vector<8x128xf32>
    %cst_57 = arith.constant 1.000000e+00 : f32
    %213 = vector.broadcast %cst_57 : f32 to vector<8x128xf32>
    %214 = arith.addf %213, %212 : vector<8x128xf32>
    %215 = arith.divf %213, %214 : vector<8x128xf32>
    %216 = vector.extract_strided_slice %203 {offsets = [0, 256], sizes = [8, 128], strides = [1, 1]} : vector<8x512xf32> to vector<8x128xf32>
    %217 = math.tanh %216 : vector<8x128xf32>
    %218 = vector.extract_strided_slice %203 {offsets = [0, 384], sizes = [8, 128], strides = [1, 1]} : vector<8x512xf32> to vector<8x128xf32>
    %219 = arith.negf %218 : vector<8x128xf32>
    %220 = math.exp %219 : vector<8x128xf32>
    %cst_58 = arith.constant 1.000000e+00 : f32
    %221 = vector.broadcast %cst_58 : f32 to vector<8x128xf32>
    %222 = arith.addf %221, %220 : vector<8x128xf32>
    %223 = arith.divf %221, %222 : vector<8x128xf32>
    %224 = arith.mulf %215, %194 : vector<8x128xf32>
    %225 = arith.mulf %209, %217 : vector<8x128xf32>
    %226 = arith.addf %224, %225 : vector<8x128xf32>
    %227 = math.tanh %226 : vector<8x128xf32>
    %228 = arith.mulf %223, %227 : vector<8x128xf32>
    %c7_i32 = arith.constant 7 : i32
    %c8_i32_59 = arith.constant 8 : i32
    %229 = arith.muli %c7_i32, %c8_i32_59 : i32
    %230 = tpu.assume_multiple %229, 8 : i32
    %231 = arith.index_cast %230 : i32 to index
    %c0_60 = arith.constant 0 : index
    %232 = vector.load %arg1[%231, %c0_60] : memref<64x512xf32, #tpu.memory_space<vmem>>, vector<8x512xf32>
    %c0_61 = arith.constant 0 : index
    %c0_62 = arith.constant 0 : index
    %233 = vector.load %arg4[%c0_61, %c0_62] : memref<128x512xf32, #tpu.memory_space<vmem>>, vector<128x512xf32>
    %cst_63 = arith.constant dense<0.000000e+00> : vector<8x512xf32>
    %234 = tpu.matmul %228, %233, %cst_63 {dimension_numbers = #tpu.dot_dimension_numbers<[1], [0], [0], [1], [0, 0, 1, 1], [], []>} : vector<8x128xf32>, vector<128x512xf32>, vector<8x512xf32> -> vector<8x512xf32>
    %235 = arith.addf %232, %234 : vector<8x512xf32>
    %236 = vector.extract_strided_slice %235 {offsets = [0, 0], sizes = [8, 128], strides = [1, 1]} : vector<8x512xf32> to vector<8x128xf32>
    %237 = arith.negf %236 : vector<8x128xf32>
    %238 = math.exp %237 : vector<8x128xf32>
    %cst_64 = arith.constant 1.000000e+00 : f32
    %239 = vector.broadcast %cst_64 : f32 to vector<8x128xf32>
    %240 = arith.addf %239, %238 : vector<8x128xf32>
    %241 = arith.divf %239, %240 : vector<8x128xf32>
    %242 = vector.extract_strided_slice %235 {offsets = [0, 128], sizes = [8, 128], strides = [1, 1]} : vector<8x512xf32> to vector<8x128xf32>
    %243 = arith.negf %242 : vector<8x128xf32>
    %244 = math.exp %243 : vector<8x128xf32>
    %cst_65 = arith.constant 1.000000e+00 : f32
    %245 = vector.broadcast %cst_65 : f32 to vector<8x128xf32>
    %246 = arith.addf %245, %244 : vector<8x128xf32>
    %247 = arith.divf %245, %246 : vector<8x128xf32>
    %248 = vector.extract_strided_slice %235 {offsets = [0, 256], sizes = [8, 128], strides = [1, 1]} : vector<8x512xf32> to vector<8x128xf32>
    %249 = math.tanh %248 : vector<8x128xf32>
    %250 = vector.extract_strided_slice %235 {offsets = [0, 384], sizes = [8, 128], strides = [1, 1]} : vector<8x512xf32> to vector<8x128xf32>
    %251 = arith.negf %250 : vector<8x128xf32>
    %252 = math.exp %251 : vector<8x128xf32>
    %cst_66 = arith.constant 1.000000e+00 : f32
    %253 = vector.broadcast %cst_66 : f32 to vector<8x128xf32>
    %254 = arith.addf %253, %252 : vector<8x128xf32>
    %255 = arith.divf %253, %254 : vector<8x128xf32>
    %256 = arith.mulf %247, %226 : vector<8x128xf32>
    %257 = arith.mulf %241, %249 : vector<8x128xf32>
    %258 = arith.addf %256, %257 : vector<8x128xf32>
    %259 = math.tanh %258 : vector<8x128xf32>
    %260 = arith.mulf %255, %259 : vector<8x128xf32>
    %c8_i32_67 = arith.constant 8 : i32
    %c0_68 = arith.constant 0 : index
    %c0_69 = arith.constant 0 : index
    %261 = vector.load %arg10[%c0_68, %c0_69] : memref<8x128xf32, #tpu.memory_space<vmem>>, vector<8x128xf32>
    tpu.vector_store %arg10[%c0_68, %c0_69], %260 {strides = array<i32>} : memref<8x128xf32, #tpu.memory_space<vmem>>, vector<8x128xf32>,
    %c0_70 = arith.constant 0 : index
    %c0_71 = arith.constant 0 : index
    %262 = vector.load %arg11[%c0_70, %c0_71] : memref<8x128xf32, #tpu.memory_space<vmem>>, vector<8x128xf32>
    tpu.vector_store %arg11[%c0_70, %c0_71], %258 {strides = array<i32>} : memref<8x128xf32, #tpu.memory_space<vmem>>, vector<8x128xf32>,
    %c0_i32_72 = arith.constant 0 : i32
    %263 = arith.cmpi eq, %arg0, %c0_i32_72 : i32
    %264 = arith.extui %263 : i1 to i32
    %c0_i32_73 = arith.constant 0 : i32
    %265 = arith.cmpi ne, %264, %c0_i32_73 : i32
    scf.if %265 {
      %c0_74 = arith.constant 0 : index
      %c0_75 = arith.constant 0 : index
      %266 = vector.load %arg8[%c0_74, %c0_75] : memref<8x128xf32, #tpu.memory_space<vmem>>, vector<8x128xf32>
      tpu.vector_store %arg8[%c0_74, %c0_75], %260 {strides = array<i32>} : memref<8x128xf32, #tpu.memory_space<vmem>>, vector<8x128xf32>,
      %c0_76 = arith.constant 0 : index
      %c0_77 = arith.constant 0 : index
      %267 = vector.load %arg9[%c0_76, %c0_77] : memref<8x128xf32, #tpu.memory_space<vmem>>, vector<8x128xf32>
      tpu.vector_store %arg9[%c0_76, %c0_77], %258 {strides = array<i32>} : memref<8x128xf32, #tpu.memory_space<vmem>>, vector<8x128xf32>,
      %c0_78 = arith.constant 0 : index
      %c0_79 = arith.constant 0 : index
      %268 = vector.load %arg5[%c0_78, %c0_79] : memref<128x128xf32, #tpu.memory_space<vmem>>, vector<128x128xf32>
      %cst_80 = arith.constant dense<0.000000e+00> : vector<8x128xf32>
      %269 = tpu.matmul %260, %268, %cst_80 {dimension_numbers = #tpu.dot_dimension_numbers<[1], [0], [0], [1], [0, 0, 1, 1], [], []>} : vector<8x128xf32>, vector<128x128xf32>, vector<8x128xf32> -> vector<8x128xf32>
      %c0_81 = arith.constant 0 : index
      %c0_82 = arith.constant 0 : index
      %270 = vector.load %arg6[%c0_81, %c0_82] : memref<1x128xf32, #tpu.memory_space<vmem>>, vector<1x128xf32>
      %271 = vector.broadcast %270 : vector<1x128xf32> to vector<8x128xf32>
      %272 = arith.addf %269, %271 : vector<8x128xf32>
      %c0_83 = arith.constant 0 : index
      %c0_84 = arith.constant 0 : index
      %273 = vector.load %arg7[%c0_83, %c0_84] : memref<8x128xf32, #tpu.memory_space<vmem>>, vector<8x128xf32>
      tpu.vector_store %arg7[%c0_83, %c0_84], %272 {strides = array<i32>} : memref<8x128xf32, #tpu.memory_space<vmem>>, vector<8x128xf32>,
    } else {
    }
    return
  }
  func.func @transform_0(%arg0: i32) -> (i32, i32) {
    %c0_i32 = arith.constant 0 : i32
    %c0_i32_0 = arith.constant 0 : i32
    return %arg0, %c0_i32 : i32, i32
  }
  func.func @transform_1(%arg0: i32) -> (i32, i32) {
    %c0_i32 = arith.constant 0 : i32
    %c0_i32_0 = arith.constant 0 : i32
    %c0_i32_1 = arith.constant 0 : i32
    return %c0_i32, %c0_i32_0 : i32, i32
  }
  func.func @transform_2(%arg0: i32) -> (i32, i32) {
    %c0_i32 = arith.constant 0 : i32
    %c0_i32_0 = arith.constant 0 : i32
    %c0_i32_1 = arith.constant 0 : i32
    return %c0_i32, %c0_i32_0 : i32, i32
  }
  func.func @transform_3(%arg0: i32) -> (i32, i32) {
    %c0_i32 = arith.constant 0 : i32
    %c0_i32_0 = arith.constant 0 : i32
    %c0_i32_1 = arith.constant 0 : i32
    return %c0_i32, %c0_i32_0 : i32, i32
  }
  func.func @transform_4(%arg0: i32) -> (i32, i32) {
    %c0_i32 = arith.constant 0 : i32
    %c0_i32_0 = arith.constant 0 : i32
    %c0_i32_1 = arith.constant 0 : i32
    return %c0_i32, %c0_i32_0 : i32, i32
  }
  func.func @transform_5(%arg0: i32) -> (i32, i32) {
    %c0_i32 = arith.constant 0 : i32
    %c0_i32_0 = arith.constant 0 : i32
    %c0_i32_1 = arith.constant 0 : i32
    return %c0_i32, %c0_i32_0 : i32, i32
  }
  func.func @transform_6(%arg0: i32) -> (i32, i32) {
    %c0_i32 = arith.constant 0 : i32
    %c0_i32_0 = arith.constant 0 : i32
    %c0_i32_1 = arith.constant 0 : i32
    return %c0_i32, %c0_i32_0 : i32, i32
  }
  func.func @transform_7(%arg0: i32) -> (i32, i32) {
    %c0_i32 = arith.constant 0 : i32
    %c0_i32_0 = arith.constant 0 : i32
    %c0_i32_1 = arith.constant 0 : i32
    return %c0_i32, %c0_i32_0 : i32, i32
  }
  func.func @transform_8(%arg0: i32) -> (i32, i32) {
    %c0_i32 = arith.constant 0 : i32
    %c0_i32_0 = arith.constant 0 : i32
    %c0_i32_1 = arith.constant 0 : i32
    return %c0_i32, %c0_i32_0 : i32, i32
  }
}

</mosaic_0001>

<llo_original>
// kernel: tpu_custom_call.1
$region0: #{tpu_custom_call.1}
  #allocation0 [shape = 'u32[]', space=smem, size = 0x4, offset = 0x4, fixed_abs, tag = 'smem constant byte address 0x4 - core index']
  #allocation1 [shape = 'u32[144,128]{1,0:T(1,128)}', space=vmem, size = 0x12000, scoped, tag = 'internal scratch']
  #allocation2 [shape = 'f32[8,128]{1,0:T(8,128)}', space=vmem, size = 0x1000, scoped, tag = 'scratch operand']
  #allocation3 [shape = 'f32[8,128]{1,0:T(8,128)}', space=vmem, size = 0x1000, scoped, tag = 'scratch operand']
  %s0 = inlined_call_operand.hbm [shape: f32[64,512], index: 0, kind: input, shape index: {}]
  %s1 = inlined_call_operand.hbm [shape: f32[8,128], index: 1, kind: input, shape index: {}]
  %s2 = inlined_call_operand.hbm [shape: f32[8,128], index: 2, kind: input, shape index: {}]
  %s3 = inlined_call_operand.hbm [shape: f32[128,512], index: 3, kind: input, shape index: {}]
  %s4 = inlined_call_operand.hbm [shape: f32[128,128], index: 4, kind: input, shape index: {}]
  %s5 = inlined_call_operand.vmem [shape: f32[1,128], index: 5, kind: input, shape index: {}]
  %s6 = inlined_call_operand.hbm [shape: f32[8,128], index: 6, kind: output, shape index: {0}]
  %s7 = inlined_call_operand.hbm [shape: f32[8,128], index: 7, kind: output, shape index: {1}]
  %s8 = inlined_call_operand.hbm [shape: f32[8,128], index: 8, kind: output, shape index: {2}]
  %9 = xla_tuple %s6, %s7, %s8
  %s10 = sld [smem:[#allocation0]]
  $region78: #{tpu_custom_call.1} parent=0
    _
  %s12 = ssub.s32 1, %s10
  %s13 = scalar_select 0, %s12, %s10
  $region1: #{tpu_custom_call.1} parent=0
    #allocation4 [shape = 'u8[131072]{0}', space=vmem, size = 0x20000, scoped, tag = 'input window, operand 0, single buffered']
    #allocation5 [shape = 's32[1]{0}', space=sflag, size = 0x4, scoped, tag = 'scoped memory for tpu_custom_call.1']
    #allocation6 [shape = 's32[1]{0}', space=sflag, size = 0x4, scoped, tag = 'scoped memory for tpu_custom_call.1']
    #allocation7 [shape = 'u8[4096]{0}', space=vmem, size = 0x1000, scoped, tag = 'input window, operand 1, single buffered']
    #allocation8 [shape = 's32[1]{0}', space=sflag, size = 0x4, scoped, tag = 'scoped memory for tpu_custom_call.1']
    #allocation9 [shape = 'u8[4096]{0}', space=vmem, size = 0x1000, scoped, tag = 'input window, operand 2, single buffered']
    #allocation10 [shape = 'u8[262144]{0}', space=vmem, size = 0x40000, scoped, tag = 'input window, operand 3, single buffered']
    #allocation11 [shape = 's32[1]{0}', space=sflag, size = 0x4, scoped, tag = 'scoped memory for tpu_custom_call.1']
    #allocation12 [shape = 'u8[65536]{0}', space=vmem, size = 0x10000, scoped, tag = 'input window, operand 4, single buffered']
    #allocation13 [shape = 'u8[4096]{0}', space=vmem, size = 0x1000, scoped, tag = 'output window, operand 0, single buffered']
    #allocation14 [shape = 'u8[4096]{0}', space=vmem, size = 0x1000, scoped, tag = 'output window, operand 1, single buffered']
    #allocation15 [shape = 's32[1]{0}', space=sflag, size = 0x4, scoped, tag = 'scoped memory for tpu_custom_call.1']
    #allocation16 [shape = 'u8[4096]{0}', space=vmem, size = 0x1000, scoped, tag = 'output window, operand 2, single buffered']
    %14 = vsyncpa [#allocation5], 0
    %15 = vsyncpa [#allocation8], 0
    %16 = vsyncpa [#allocation11], 0
    %17 = vsyncpa [#allocation6], 0
    %18 = vsyncpa [#allocation15], 0
    // Predicated region
    $region2: #{tpu_custom_call.1} parent=1 // pred_check
      _
    $region3: #{tpu_custom_call.1} parent=1 // pred_check_branch
      %20 = sbr.rel (0) target = $region5
    $region4: #{tpu_custom_call.1} parent=1 // pred_region
      %s22 = ssub.s32 4096, 4096
      %23 = vsyncadd [#allocation5], %s22
      %s24 = sshll.u32 [#allocation4], 4
      %s25 = int_to_ptr.vmem [resolvable:$true] %s24
      %30 = dma.hbm_to_vmem [thread:$0]  %s0, 4096, %s25, [#allocation5], 512, 512, 32
    $region5: #{tpu_custom_call.1} parent=1 // pred_fallthru
      _
    // Predicated region
    $region6: #{tpu_custom_call.1} parent=1 // pred_check
      _
    $region7: #{tpu_custom_call.1} parent=1 // pred_check_branch
      %32 = sbr.rel (0) target = $region9
    $region8: #{tpu_custom_call.1} parent=1 // pred_region
      %s34 = ssub.s32 128, 128
      %35 = vsyncadd [#allocation8], %s34
      %s37 = sshll.u32 [#allocation7], 4
      %s38 = int_to_ptr.vmem [resolvable:$true] %s37
      %40 = dma.hbm_to_vmem [thread:$0]  %s1, 128, %s38, [#allocation8]
    $region9: #{tpu_custom_call.1} parent=1 // pred_fallthru
      _
    // Predicated region
    $region10: #{tpu_custom_call.1} parent=1 // pred_check
      _
    $region11: #{tpu_custom_call.1} parent=1 // pred_check_branch
      %42 = sbr.rel (0) target = $region13
    $region12: #{tpu_custom_call.1} parent=1 // pred_region
      %s44 = ssub.s32 128, 128
      %45 = vsyncadd [#allocation8], %s44
      %s47 = sshll.u32 [#allocation9], 4
      %s48 = int_to_ptr.vmem [resolvable:$true] %s47
      %50 = dma.hbm_to_vmem [thread:$0]  %s2, 128, %s48, [#allocation8]
    $region13: #{tpu_custom_call.1} parent=1 // pred_fallthru
      _
    // Predicated region
    $region14: #{tpu_custom_call.1} parent=1 // pred_check
      _
    $region15: #{tpu_custom_call.1} parent=1 // pred_check_branch
      %52 = sbr.rel (0) target = $region17
    $region16: #{tpu_custom_call.1} parent=1 // pred_region
      %s54 = ssub.s32 8192, 8192
      %55 = vsyncadd [#allocation11], %s54
      %s56 = sshll.u32 [#allocation10], 4
      %s57 = int_to_ptr.vmem [resolvable:$true] %s56
      %62 = dma.hbm_to_vmem [thread:$0]  %s3, 8192, %s57, [#allocation11], 512, 512, 32
    $region17: #{tpu_custom_call.1} parent=1 // pred_fallthru
      _
    // Predicated region
    $region18: #{tpu_custom_call.1} parent=1 // pred_check
      _
    $region19: #{tpu_custom_call.1} parent=1 // pred_check_branch
      %64 = sbr.rel (0) target = $region21
    $region20: #{tpu_custom_call.1} parent=1 // pred_region
      %s66 = ssub.s32 2048, 2048
      %67 = vsyncadd [#allocation11], %s66
      %s68 = sshll.u32 [#allocation12], 4
      %s69 = int_to_ptr.vmem [resolvable:$true] %s68
      %74 = dma.hbm_to_vmem [thread:$0]  %s4, 2048, %s69, [#allocation11], 128, 128, 8
    $region21: #{tpu_custom_call.1} parent=1 // pred_fallthru
      _
    // Predicated region
    $region22: #{tpu_custom_call.1} parent=1 // pred_check
      _
    $region23: #{tpu_custom_call.1} parent=1 // pred_check_branch
      %76 = sbr.rel (0) target = $region25
    $region24: #{tpu_custom_call.1} parent=1 // pred_region
      _
    $region25: #{tpu_custom_call.1} parent=1 // pred_fallthru
      _
    // Predicated region
    $region26: #{tpu_custom_call.1} parent=1 // pred_check
      _
    $region27: #{tpu_custom_call.1} parent=1 // pred_check_branch
      %78 = sbr.rel (0) target = $region29
    $region28: #{tpu_custom_call.1} parent=1 // pred_region
      %79 = dma.done [#allocation5], 4096
    $region29: #{tpu_custom_call.1} parent=1 // pred_fallthru
      _
    // Predicated region
    $region30: #{tpu_custom_call.1} parent=1 // pred_check
      _
    $region31: #{tpu_custom_call.1} parent=1 // pred_check_branch
      %81 = sbr.rel (0) target = $region33
    $region32: #{tpu_custom_call.1} parent=1 // pred_region
      %82 = dma.done [#allocation8], 128
    $region33: #{tpu_custom_call.1} parent=1 // pred_fallthru
      _
    // Predicated region
    $region34: #{tpu_custom_call.1} parent=1 // pred_check
      _
    $region35: #{tpu_custom_call.1} parent=1 // pred_check_branch
      %84 = sbr.rel (0) target = $region37
    $region36: #{tpu_custom_call.1} parent=1 // pred_region
      %85 = dma.done [#allocation8], 128
    $region37: #{tpu_custom_call.1} parent=1 // pred_fallthru
      _
    // Predicated region
    $region38: #{tpu_custom_call.1} parent=1 // pred_check
      _
    $region39: #{tpu_custom_call.1} parent=1 // pred_check_branch
      %87 = sbr.rel (0) target = $region41
    $region40: #{tpu_custom_call.1} parent=1 // pred_region
      %88 = dma.done [#allocation11], 8192
    $region41: #{tpu_custom_call.1} parent=1 // pred_fallthru
      _
    // Predicated region
    $region42: #{tpu_custom_call.1} parent=1 // pred_check
      _
    $region43: #{tpu_custom_call.1} parent=1 // pred_check_branch
      %90 = sbr.rel (0) target = $region45
    $region44: #{tpu_custom_call.1} parent=1 // pred_region
      %91 = dma.done [#allocation11], 2048
    $region45: #{tpu_custom_call.1} parent=1 // pred_fallthru
      _
    %p92 = scmp.eq.s32.totalorder 0, 0
    // Predicated region
    $region46: #{tpu_custom_call.1} parent=1 // pred_check
      %p93 = pneg %p92
    $region47: #{tpu_custom_call.1} parent=1 // pred_check_branch
      %95 = sbr.rel (%p93) target = $region49
    $region48: #{tpu_custom_call.1} parent=1 // pred_region
      %v96 = vld [vmem:[#allocation7] sm:$0xff]
      %97 = vst [vmem:[#allocation2] sm:$0xff] %v96
      %v98 = vld [vmem:[#allocation9] sm:$0xff]
      %99 = vst [vmem:[#allocation3] sm:$0xff] %v98
    $region49: #{tpu_custom_call.1} parent=1 // pred_fallthru
      _
    %v100 = vld [vmem:[#allocation2] sm:$0xff]
    %v101 = vld [vmem:[#allocation3] sm:$0xff]
    %s102 = smul.u32 0, 4
    %s103 = smul.addr %s102, 8
    %s104 = scalar_lea.vmem [#allocation4], %s103
    %v105 = vld [vmem:[%s104] sm:$0xff]
    %v106 = vld [vmem:[%s104 + $0x8] sm:$0xff]
    %v107 = vld [vmem:[%s104 + $0x10] sm:$0xff]
    %v108 = vld [vmem:[%s104 + $0x18] sm:$0xff]
    %v109 = vld [vmem:[#allocation10] sm:$0xff]
    %v110 = vld [vmem:[#allocation10 + $0x8] sm:$0xff]
    %v111 = vld [vmem:[#allocation10 + $0x10] sm:$0xff]
    %v112 = vld [vmem:[#allocation10 + $0x18] sm:$0xff]
    %v113 = vld [vmem:[#allocation10 + $0x20] sm:$0xff]
    %v114 = vld [vmem:[#allocation10 + $0x28] sm:$0xff]
    %v115 = vld [vmem:[#allocation10 + $0x30] sm:$0xff]
    %v116 = vld [vmem:[#allocation10 + $0x38] sm:$0xff]
    %v117 = vld [vmem:[#allocation10 + $0x40] sm:$0xff]
    %v118 = vld [vmem:[#allocation10 + $0x48] sm:$0xff]
    %v119 = vld [vmem:[#allocation10 + $0x50] sm:$0xff]
    %v120 = vld [vmem:[#allocation10 + $0x58] sm:$0xff]
    %v121 = vld [vmem:[#allocation10 + $0x60] sm:$0xff]
    %v122 = vld [vmem:[#allocation10 + $0x68] sm:$0xff]
    %v123 = vld [vmem:[#allocation10 + $0x70] sm:$0xff]
    %v124 = vld [vmem:[#allocation10 + $0x78] sm:$0xff]
    %v125 = vld [vmem:[#allocation10 + $0x80] sm:$0xff]
    %v126 = vld [vmem:[#allocation10 + $0x88] sm:$0xff]
    %v127 = vld [vmem:[#allocation10 + $0x90] sm:$0xff]
    %v128 = vld [vmem:[#allocation10 + $0x98] sm:$0xff]
    %v129 = vld [vmem:[#allocation10 + $0xa0] sm:$0xff]
    %v130 = vld [vmem:[#allocation10 + $0xa8] sm:$0xff]
    %v131 = vld [vmem:[#allocation10 + $0xb0] sm:$0xff]
    %v132 = vld [vmem:[#allocation10 + $0xb8] sm:$0xff]
    %v133 = vld [vmem:[#allocation10 + $0xc0] sm:$0xff]
    %v134 = vld [vmem:[#allocation10 + $0xc8] sm:$0xff]
    %v135 = vld [vmem:[#allocation10 + $0xd0] sm:$0xff]
    %v136 = vld [vmem:[#allocation10 + $0xd8] sm:$0xff]
    %v137 = vld [vmem:[#allocation10 + $0xe0] sm:$0xff]
    %v138 = vld [vmem:[#allocation10 + $0xe8] sm:$0xff]
    %v139 = vld [vmem:[#allocation10 + $0xf0] sm:$0xff]
    %v140 = vld [vmem:[#allocation10 + $0xf8] sm:$0xff]
    %v141 = vld [vmem:[#allocation10 + $0x100] sm:$0xff]
    %v142 = vld [vmem:[#allocation10 + $0x108] sm:$0xff]
    %v143 = vld [vmem:[#allocation10 + $0x110] sm:$0xff]
    %v144 = vld [vmem:[#allocation10 + $0x118] sm:$0xff]
    %v145 = vld [vmem:[#allocation10 + $0x120] sm:$0xff]
    %v146 = vld [vmem:[#allocation10 + $0x128] sm:$0xff]
    %v147 = vld [vmem:[#allocation10 + $0x130] sm:$0xff]
    %v148 = vld [vmem:[#allocation10 + $0x138] sm:$0xff]
    %v149 = vld [vmem:[#allocation10 + $0x140] sm:$0xff]
    %v150 = vld [vmem:[#allocation10 + $0x148] sm:$0xff]
    %v151 = vld [vmem:[#allocation10 + $0x150] sm:$0xff]
    %v152 = vld [vmem:[#allocation10 + $0x158] sm:$0xff]
    %v153 = vld [vmem:[#allocation10 + $0x160] sm:$0xff]
    %v154 = vld [vmem:[#allocation10 + $0x168] sm:$0xff]
    %v155 = vld [vmem:[#allocation10 + $0x170] sm:$0xff]
    %v156 = vld [vmem:[#allocation10 + $0x178] sm:$0xff]
    %v157 = vld [vmem:[#allocation10 + $0x180] sm:$0xff]
    %v158 = vld [vmem:[#allocation10 + $0x188] sm:$0xff]
    %v159 = vld [vmem:[#allocation10 + $0x190] sm:$0xff]
    %v160 = vld [vmem:[#allocation10 + $0x198] sm:$0xff]
    %v161 = vld [vmem:[#allocation10 + $0x1a0] sm:$0xff]
    %v162 = vld [vmem:[#allocation10 + $0x1a8] sm:$0xff]
    %v163 = vld [vmem:[#allocation10 + $0x1b0] sm:$0xff]
    %v164 = vld [vmem:[#allocation10 + $0x1b8] sm:$0xff]
    %v165 = vld [vmem:[#allocation10 + $0x1c0] sm:$0xff]
    %v166 = vld [vmem:[#allocation10 + $0x1c8] sm:$0xff]
    %v167 = vld [vmem:[#allocation10 + $0x1d0] sm:$0xff]
    %v168 = vld [vmem:[#allocation10 + $0x1d8] sm:$0xff]
    %v169 = vld [vmem:[#allocation10 + $0x1e0] sm:$0xff]
    %v170 = vld [vmem:[#allocation10 + $0x1e8] sm:$0xff]
    %v171 = vld [vmem:[#allocation10 + $0x1f0] sm:$0xff]
    %v172 = vld [vmem:[#allocation10 + $0x1f8] sm:$0xff]
    %173 = vmatprep.subr.mxu0 %v110
    %174 = vmatpush1.msra.mxu0 %v109
    %175 = vmatprep.subr.mxu0 %v114
    %176 = vmatpush1.msra.mxu0 %v113
    %177 = vmatprep.subr.mxu0 %v118
    %178 = vmatpush1.msra.mxu0 %v117
    %179 = vmatprep.subr.mxu0 %v122
    %180 = vmatpush1.msra.mxu0 %v121
    %181 = vmatprep.subr.mxu0 %v126
    %182 = vmatpush1.msra.mxu0 %v125
    %183 = vmatprep.subr.mxu0 %v130
    %184 = vmatpush1.msra.mxu0 %v129
    %185 = vmatprep.subr.mxu0 %v134
    %186 = vmatpush1.msra.mxu0 %v133
    %187 = vmatprep.subr.mxu0 %v138
    %188 = vmatpush1.msra.mxu0 %v137
    %189 = vmatprep.subr.mxu0 %v142
    %190 = vmatpush1.msra.mxu0 %v141
    %191 = vmatprep.subr.mxu0 %v146
    %192 = vmatpush1.msra.mxu0 %v145
    %193 = vmatprep.subr.mxu0 %v150
    %194 = vmatpush1.msra.mxu0 %v149
    %195 = vmatprep.subr.mxu0 %v154
    %196 = vmatpush1.msra.mxu0 %v153
    %197 = vmatprep.subr.mxu0 %v158
    %198 = vmatpush1.msra.mxu0 %v157
    %199 = vmatprep.subr.mxu0 %v162
    %200 = vmatpush1.msra.mxu0 %v161
    %201 = vmatprep.subr.mxu0 %v166
    %202 = vmatpush1.msra.mxu0 %v165
    %203 = vmatprep.subr.mxu0 %v170
    %204 = vmatpush1.msra.mxu0 %v169
    %205 = vmatprep.subr.mxu0 0.0
    %206 = vmatpush1.msra.mxu0 0.0
    %207 = vmatprep.subr.mxu0 0.0
    %208 = vmatpush1.msra.mxu0 0.0
    %209 = vmatprep.subr.mxu0 0.0
    %210 = vmatpush1.msra.mxu0 0.0
    %211 = vmatprep.subr.mxu0 0.0
    %212 = vmatpush1.msra.mxu0 0.0
    %213 = vmatprep.subr.mxu0 0.0
    %214 = vmatpush1.msra.mxu0 0.0
    %215 = vmatprep.subr.mxu0 0.0
    %216 = vmatpush1.msra.mxu0 0.0
    %217 = vmatprep.subr.mxu0 0.0
    %218 = vmatpush1.msra.mxu0 0.0
    %219 = vmatprep.subr.mxu0 0.0
    %220 = vmatpush1.msra.mxu0 0.0
    %221 = vmatprep.subr.mxu0 0.0
    %222 = vmatpush1.msra.mxu0 0.0
    %223 = vmatprep.subr.mxu0 0.0
    %224 = vmatpush1.msra.mxu0 0.0
    %225 = vmatprep.subr.mxu0 0.0
    %226 = vmatpush1.msra.mxu0 0.0
    %227 = vmatprep.subr.mxu0 0.0
    %228 = vmatpush1.msra.mxu0 0.0
    %229 = vmatprep.subr.mxu0 0.0
    %230 = vmatpush1.msra.mxu0 0.0
    %231 = vmatprep.subr.mxu0 0.0
    %232 = vmatpush1.msra.mxu0 0.0
    %233 = vmatprep.subr.mxu0 0.0
    %234 = vmatpush1.msra.mxu0 0.0
    %235 = vmatprep.subr.mxu0 0.0
    %236 = vmatpush1.msra.mxu0 0.0
    %237 = vmatprep.mubr.f32.mxu0 0.0
    %238 = vmatmul.mubr.f32.gmra.mrb[0].mxu0 %v100
    %v239 = vpop.f32.mrb[0].mxu0
    %v240 = vadd.f32 0.0, %v239
    %v241 = vpop.f32.mrb[0].mxu0
    %v242 = vadd.f32 0.0, %v241
    %243 = vdwg.mxu0
    %244 = vmatprep.subr.mxu0 %v112
    %245 = vmatpush1.msra.mxu0 %v111
    %246 = vmatprep.subr.mxu0 %v116
    %247 = vmatpush1.msra.mxu0 %v115
    %248 = vmatprep.subr.mxu0 %v120
    %249 = vmatpush1.msra.mxu0 %v119
    %250 = vmatprep.subr.mxu0 %v124
    %251 = vmatpush1.msra.mxu0 %v123
    %252 = vmatprep.subr.mxu0 %v128
    %253 = vmatpush1.msra.mxu0 %v127
    %254 = vmatprep.subr.mxu0 %v132
    %255 = vmatpush1.msra.mxu0 %v131
    %256 = vmatprep.subr.mxu0 %v136
    %257 = vmatpush1.msra.mxu0 %v135
    %258 = vmatprep.subr.mxu0 %v140
    %259 = vmatpush1.msra.mxu0 %v139
    %260 = vmatprep.subr.mxu0 %v144
    %261 = vmatpush1.msra.mxu0 %v143
    %262 = vmatprep.subr.mxu0 %v148
    %263 = vmatpush1.msra.mxu0 %v147
    %264 = vmatprep.subr.mxu0 %v152
    %265 = vmatpush1.msra.mxu0 %v151
    %266 = vmatprep.subr.mxu0 %v156
    %267 = vmatpush1.msra.mxu0 %v155
    %268 = vmatprep.subr.mxu0 %v160
    %269 = vmatpush1.msra.mxu0 %v159
    %270 = vmatprep.subr.mxu0 %v164
    %271 = vmatpush1.msra.mxu0 %v163
    %272 = vmatprep.subr.mxu0 %v168
    %273 = vmatpush1.msra.mxu0 %v167
    %274 = vmatprep.subr.mxu0 %v172
    %275 = vmatpush1.msra.mxu0 %v171
    %276 = vmatprep.subr.mxu0 0.0
    %277 = vmatpush1.msra.mxu0 0.0
    %278 = vmatprep.subr.mxu0 0.0
    %279 = vmatpush1.msra.mxu0 0.0
    %280 = vmatprep.subr.mxu0 0.0
    %281 = vmatpush1.msra.mxu0 0.0
    %282 = vmatprep.subr.mxu0 0.0
    %283 = vmatpush1.msra.mxu0 0.0
    %284 = vmatprep.subr.mxu0 0.0
    %285 = vmatpush1.msra.mxu0 0.0
    %286 = vmatprep.subr.mxu0 0.0
    %287 = vmatpush1.msra.mxu0 0.0
    %288 = vmatprep.subr.mxu0 0.0
    %289 = vmatpush1.msra.mxu0 0.0
    %290 = vmatprep.subr.mxu0 0.0
    %291 = vmatpush1.msra.mxu0 0.0
    %292 = vmatprep.subr.mxu0 0.0
    %293 = vmatpush1.msra.mxu0 0.0
    %294 = vmatprep.subr.mxu0 0.0
    %295 = vmatpush1.msra.mxu0 0.0
    %296 = vmatprep.subr.mxu0 0.0
    %297 = vmatpush1.msra.mxu0 0.0
    %298 = vmatprep.subr.mxu0 0.0
    %299 = vmatpush1.msra.mxu0 0.0
    %300 = vmatprep.subr.mxu0 0.0
    %301 = vmatpush1.msra.mxu0 0.0
    %302 = vmatprep.subr.mxu0 0.0
    %303 = vmatpush1.msra.mxu0 0.0
    %304 = vmatprep.subr.mxu0 0.0
    %305 = vmatpush1.msra.mxu0 0.0
    %306 = vmatprep.subr.mxu0 0.0
    %307 = vmatpush1.msra.mxu0 0.0
    %308 = vmatprep.mubr.f32.mxu0 0.0
    %309 = vmatmul.mubr.f32.gmra.mrb[0].mxu0 %v100
    %v310 = vpop.f32.mrb[0].mxu0
    %v311 = vadd.f32 0.0, %v310
    %v312 = vpop.f32.mrb[0].mxu0
    %v313 = vadd.f32 0.0, %v312
    %314 = vdwg.mxu0
    %v315 = vadd.f32 %v105, %v240
    %v316 = vadd.f32 %v106, %v242
    %v317 = vadd.f32 %v107, %v311
    %v318 = vadd.f32 %v108, %v313
    %v319 = vxor.u32 %v315, 2147483648
    %v320 = vmul.f32 %v319, 1.442695
    %v321 = vpow.pop %v320
    %v322 = vadd.f32 %v321, 1.0
    %v323 = vrcp.pop %v322
    %v324 = vmul.f32 1.0, %v323
    %v325 = vxor.u32 %v316, 2147483648
    %v326 = vmul.f32 %v325, 1.442695
    %v327 = vpow.pop %v326
    %v328 = vadd.f32 %v327, 1.0
    %v329 = vrcp.pop %v328
    %v330 = vmul.f32 1.0, %v329
    %v331 = vtanh.pop %v317
    %v332 = vxor.u32 %v318, 2147483648
    %v333 = vmul.f32 %v332, 1.442695
    %v334 = vpow.pop %v333
    %v335 = vadd.f32 %v334, 1.0
    %v336 = vrcp.pop %v335
    %v337 = vmul.f32 1.0, %v336
    %v338 = vmul.f32 %v330, %v101
    %v339 = vmul.f32 %v324, %v331
    %v340 = vadd.f32 %v338, %v339
    %v341 = vtanh.pop %v340
    %v342 = vmul.f32 %v337, %v341
    %s343 = smul.u32 1, 4
    %s344 = smul.addr %s343, 8
    %s345 = scalar_lea.vmem [#allocation4], %s344
    %v346 = vld [vmem:[%s345] sm:$0xff]
    %v347 = vld [vmem:[%s345 + $0x8] sm:$0xff]
    %v348 = vld [vmem:[%s345 + $0x10] sm:$0xff]
    %v349 = vld [vmem:[%s345 + $0x18] sm:$0xff]
    %350 = vmatprep.subr.mxu0 %v110
    %351 = vmatpush1.msra.mxu0 %v109
    %352 = vmatprep.subr.mxu0 %v114
    %353 = vmatpush1.msra.mxu0 %v113
    %354 = vmatprep.subr.mxu0 %v118
    %355 = vmatpush1.msra.mxu0 %v117
    %356 = vmatprep.subr.mxu0 %v122
    %357 = vmatpush1.msra.mxu0 %v121
    %358 = vmatprep.subr.mxu0 %v126
    %359 = vmatpush1.msra.mxu0 %v125
    %360 = vmatprep.subr.mxu0 %v130
    %361 = vmatpush1.msra.mxu0 %v129
    %362 = vmatprep.subr.mxu0 %v134
    %363 = vmatpush1.msra.mxu0 %v133
    %364 = vmatprep.subr.mxu0 %v138
    %365 = vmatpush1.msra.mxu0 %v137
    %366 = vmatprep.subr.mxu0 %v142
    %367 = vmatpush1.msra.mxu0 %v141
    %368 = vmatprep.subr.mxu0 %v146
    %369 = vmatpush1.msra.mxu0 %v145
    %370 = vmatprep.subr.mxu0 %v150
    %371 = vmatpush1.msra.mxu0 %v149
    %372 = vmatprep.subr.mxu0 %v154
    %373 = vmatpush1.msra.mxu0 %v153
    %374 = vmatprep.subr.mxu0 %v158
    %375 = vmatpush1.msra.mxu0 %v157
    %376 = vmatprep.subr.mxu0 %v162
    %377 = vmatpush1.msra.mxu0 %v161
    %378 = vmatprep.subr.mxu0 %v166
    %379 = vmatpush1.msra.mxu0 %v165
    %380 = vmatprep.subr.mxu0 %v170
    %381 = vmatpush1.msra.mxu0 %v169
    %382 = vmatprep.subr.mxu0 0.0
    %383 = vmatpush1.msra.mxu0 0.0
    %384 = vmatprep.subr.mxu0 0.0
    %385 = vmatpush1.msra.mxu0 0.0
    %386 = vmatprep.subr.mxu0 0.0
    %387 = vmatpush1.msra.mxu0 0.0
    %388 = vmatprep.subr.mxu0 0.0
    %389 = vmatpush1.msra.mxu0 0.0
    %390 = vmatprep.subr.mxu0 0.0
    %391 = vmatpush1.msra.mxu0 0.0
    %392 = vmatprep.subr.mxu0 0.0
    %393 = vmatpush1.msra.mxu0 0.0
    %394 = vmatprep.subr.mxu0 0.0
    %395 = vmatpush1.msra.mxu0 0.0
    %396 = vmatprep.subr.mxu0 0.0
    %397 = vmatpush1.msra.mxu0 0.0
    %398 = vmatprep.subr.mxu0 0.0
    %399 = vmatpush1.msra.mxu0 0.0
    %400 = vmatprep.subr.mxu0 0.0
    %401 = vmatpush1.msra.mxu0 0.0
    %402 = vmatprep.subr.mxu0 0.0
    %403 = vmatpush1.msra.mxu0 0.0
    %404 = vmatprep.subr.mxu0 0.0
    %405 = vmatpush1.msra.mxu0 0.0
    %406 = vmatprep.subr.mxu0 0.0
    %407 = vmatpush1.msra.mxu0 0.0
    %408 = vmatprep.subr.mxu0 0.0
    %409 = vmatpush1.msra.mxu0 0.0
    %410 = vmatprep.subr.mxu0 0.0
    %411 = vmatpush1.msra.mxu0 0.0
    %412 = vmatprep.subr.mxu0 0.0
    %413 = vmatpush1.msra.mxu0 0.0
    %414 = vmatprep.mubr.f32.mxu0 0.0
    %415 = vmatmul.mubr.f32.gmra.mrb[0].mxu0 %v342
    %v416 = vpop.f32.mrb[0].mxu0
    %v417 = vadd.f32 0.0, %v416
    %v418 = vpop.f32.mrb[0].mxu0
    %v419 = vadd.f32 0.0, %v418
    %420 = vdwg.mxu0
    %421 = vmatprep.subr.mxu0 %v112
    %422 = vmatpush1.msra.mxu0 %v111
    %423 = vmatprep.subr.mxu0 %v116
    %424 = vmatpush1.msra.mxu0 %v115
    %425 = vmatprep.subr.mxu0 %v120
    %426 = vmatpush1.msra.mxu0 %v119
    %427 = vmatprep.subr.mxu0 %v124
    %428 = vmatpush1.msra.mxu0 %v123
    %429 = vmatprep.subr.mxu0 %v128
    %430 = vmatpush1.msra.mxu0 %v127
    %431 = vmatprep.subr.mxu0 %v132
    %432 = vmatpush1.msra.mxu0 %v131
    %433 = vmatprep.subr.mxu0 %v136
    %434 = vmatpush1.msra.mxu0 %v135
    %435 = vmatprep.subr.mxu0 %v140
    %436 = vmatpush1.msra.mxu0 %v139
    %437 = vmatprep.subr.mxu0 %v144
    %438 = vmatpush1.msra.mxu0 %v143
    %439 = vmatprep.subr.mxu0 %v148
    %440 = vmatpush1.msra.mxu0 %v147
    %441 = vmatprep.subr.mxu0 %v152
    %442 = vmatpush1.msra.mxu0 %v151
    %443 = vmatprep.subr.mxu0 %v156
    %444 = vmatpush1.msra.mxu0 %v155
    %445 = vmatprep.subr.mxu0 %v160
    %446 = vmatpush1.msra.mxu0 %v159
    %447 = vmatprep.subr.mxu0 %v164
    %448 = vmatpush1.msra.mxu0 %v163
    %449 = vmatprep.subr.mxu0 %v168
    %450 = vmatpush1.msra.mxu0 %v167
    %451 = vmatprep.subr.mxu0 %v172
    %452 = vmatpush1.msra.mxu0 %v171
    %453 = vmatprep.subr.mxu0 0.0
    %454 = vmatpush1.msra.mxu0 0.0
    %455 = vmatprep.subr.mxu0 0.0
    %456 = vmatpush1.msra.mxu0 0.0
    %457 = vmatprep.subr.mxu0 0.0
    %458 = vmatpush1.msra.mxu0 0.0
    %459 = vmatprep.subr.mxu0 0.0
    %460 = vmatpush1.msra.mxu0 0.0
    %461 = vmatprep.subr.mxu0 0.0
    %462 = vmatpush1.msra.mxu0 0.0
    %463 = vmatprep.subr.mxu0 0.0
    %464 = vmatpush1.msra.mxu0 0.0
    %465 = vmatprep.subr.mxu0 0.0
    %466 = vmatpush1.msra.mxu0 0.0
    %467 = vmatprep.subr.mxu0 0.0
    %468 = vmatpush1.msra.mxu0 0.0
    %469 = vmatprep.subr.mxu0 0.0
    %470 = vmatpush1.msra.mxu0 0.0
    %471 = vmatprep.subr.mxu0 0.0
    %472 = vmatpush1.msra.mxu0 0.0
    %473 = vmatprep.subr.mxu0 0.0
    %474 = vmatpush1.msra.mxu0 0.0
    %475 = vmatprep.subr.mxu0 0.0
    %476 = vmatpush1.msra.mxu0 0.0
    %477 = vmatprep.subr.mxu0 0.0
    %478 = vmatpush1.msra.mxu0 0.0
    %479 = vmatprep.subr.mxu0 0.0
    %480 = vmatpush1.msra.mxu0 0.0
    %481 = vmatprep.subr.mxu0 0.0
    %482 = vmatpush1.msra.mxu0 0.0
    %483 = vmatprep.subr.mxu0 0.0
    %484 = vmatpush1.msra.mxu0 0.0
    %485 = vmatprep.mubr.f32.mxu0 0.0
    %486 = vmatmul.mubr.f32.gmra.mrb[0].mxu0 %v342
    %v487 = vpop.f32.mrb[0].mxu0
    %v488 = vadd.f32 0.0, %v487
    %v489 = vpop.f32.mrb[0].mxu0
    %v490 = vadd.f32 0.0, %v489
    %491 = vdwg.mxu0
    %v492 = vadd.f32 %v346, %v417
    %v493 = vadd.f32 %v347, %v419
    %v494 = vadd.f32 %v348, %v488
    %v495 = vadd.f32 %v349, %v490
    %v496 = vxor.u32 %v492, 2147483648
    %v497 = vmul.f32 %v496, 1.442695
    %v498 = vpow.pop %v497
    %v499 = vadd.f32 %v498, 1.0
    %v500 = vrcp.pop %v499
    %v501 = vmul.f32 1.0, %v500
    %v502 = vxor.u32 %v493, 2147483648
    %v503 = vmul.f32 %v502, 1.442695
    %v504 = vpow.pop %v503
    %v505 = vadd.f32 %v504, 1.0
    %v506 = vrcp.pop %v505
    %v507 = vmul.f32 1.0, %v506
    %v508 = vtanh.pop %v494
    %v509 = vxor.u32 %v495, 2147483648
    %v510 = vmul.f32 %v509, 1.442695
    %v511 = vpow.pop %v510
    %v512 = vadd.f32 %v511, 1.0
    %v513 = vrcp.pop %v512
    %v514 = vmul.f32 1.0, %v513
    %v515 = vmul.f32 %v507, %v340
    %v516 = vmul.f32 %v501, %v508
    %v517 = vadd.f32 %v515, %v516
    %v518 = vtanh.pop %v517
    %v519 = vmul.f32 %v514, %v518
    %s520 = smul.u32 2, 4
    %s521 = smul.addr %s520, 8
    %s522 = scalar_lea.vmem [#allocation4], %s521
    %v523 = vld [vmem:[%s522] sm:$0xff]
    %v524 = vld [vmem:[%s522 + $0x8] sm:$0xff]
    %v525 = vld [vmem:[%s522 + $0x10] sm:$0xff]
    %v526 = vld [vmem:[%s522 + $0x18] sm:$0xff]
    %527 = vmatprep.subr.mxu0 %v110
    %528 = vmatpush1.msra.mxu0 %v109
    %529 = vmatprep.subr.mxu0 %v114
    %530 = vmatpush1.msra.mxu0 %v113
    %531 = vmatprep.subr.mxu0 %v118
    %532 = vmatpush1.msra.mxu0 %v117
    %533 = vmatprep.subr.mxu0 %v122
    %534 = vmatpush1.msra.mxu0 %v121
    %535 = vmatprep.subr.mxu0 %v126
    %536 = vmatpush1.msra.mxu0 %v125
    %537 = vmatprep.subr.mxu0 %v130
    %538 = vmatpush1.msra.mxu0 %v129
    %539 = vmatprep.subr.mxu0 %v134
    %540 = vmatpush1.msra.mxu0 %v133
    %541 = vmatprep.subr.mxu0 %v138
    %542 = vmatpush1.msra.mxu0 %v137
    %543 = vmatprep.subr.mxu0 %v142
    %544 = vmatpush1.msra.mxu0 %v141
    %545 = vmatprep.subr.mxu0 %v146
    %546 = vmatpush1.msra.mxu0 %v145
    %547 = vmatprep.subr.mxu0 %v150
    %548 = vmatpush1.msra.mxu0 %v149
    %549 = vmatprep.subr.mxu0 %v154
    %550 = vmatpush1.msra.mxu0 %v153
    %551 = vmatprep.subr.mxu0 %v158
    %552 = vmatpush1.msra.mxu0 %v157
    %553 = vmatprep.subr.mxu0 %v162
    %554 = vmatpush1.msra.mxu0 %v161
    %555 = vmatprep.subr.mxu0 %v166
    %556 = vmatpush1.msra.mxu0 %v165
    %557 = vmatprep.subr.mxu0 %v170
    %558 = vmatpush1.msra.mxu0 %v169
    %559 = vmatprep.subr.mxu0 0.0
    %560 = vmatpush1.msra.mxu0 0.0
    %561 = vmatprep.subr.mxu0 0.0
    %562 = vmatpush1.msra.mxu0 0.0
    %563 = vmatprep.subr.mxu0 0.0
    %564 = vmatpush1.msra.mxu0 0.0
    %565 = vmatprep.subr.mxu0 0.0
    %566 = vmatpush1.msra.mxu0 0.0
    %567 = vmatprep.subr.mxu0 0.0
    %568 = vmatpush1.msra.mxu0 0.0
    %569 = vmatprep.subr.mxu0 0.0
    %570 = vmatpush1.msra.mxu0 0.0
    %571 = vmatprep.subr.mxu0 0.0
    %572 = vmatpush1.msra.mxu0 0.0
    %573 = vmatprep.subr.mxu0 0.0
    %574 = vmatpush1.msra.mxu0 0.0
    %575 = vmatprep.subr.mxu0 0.0
    %576 = vmatpush1.msra.mxu0 0.0
    %577 = vmatprep.subr.mxu0 0.0
    %578 = vmatpush1.msra.mxu0 0.0
    %579 = vmatprep.subr.mxu0 0.0
    %580 = vmatpush1.msra.mxu0 0.0
    %581 = vmatprep.subr.mxu0 0.0
    %582 = vmatpush1.msra.mxu0 0.0
    %583 = vmatprep.subr.mxu0 0.0
    %584 = vmatpush1.msra.mxu0 0.0
    %585 = vmatprep.subr.mxu0 0.0
    %586 = vmatpush1.msra.mxu0 0.0
    %587 = vmatprep.subr.mxu0 0.0
    %588 = vmatpush1.msra.mxu0 0.0
    %589 = vmatprep.subr.mxu0 0.0
    %590 = vmatpush1.msra.mxu0 0.0
    %591 = vmatprep.mubr.f32.mxu0 0.0
    %592 = vmatmul.mubr.f32.gmra.mrb[0].mxu0 %v519
    %v593 = vpop.f32.mrb[0].mxu0
    %v594 = vadd.f32 0.0, %v593
    %v595 = vpop.f32.mrb[0].mxu0
    %v596 = vadd.f32 0.0, %v595
    %597 = vdwg.mxu0
    %598 = vmatprep.subr.mxu0 %v112
    %599 = vmatpush1.msra.mxu0 %v111
    %600 = vmatprep.subr.mxu0 %v116
    %601 = vmatpush1.msra.mxu0 %v115
    %602 = vmatprep.subr.mxu0 %v120
    %603 = vmatpush1.msra.mxu0 %v119
    %604 = vmatprep.subr.mxu0 %v124
    %605 = vmatpush1.msra.mxu0 %v123
    %606 = vmatprep.subr.mxu0 %v128
    %607 = vmatpush1.msra.mxu0 %v127
    %608 = vmatprep.subr.mxu0 %v132
    %609 = vmatpush1.msra.mxu0 %v131
    %610 = vmatprep.subr.mxu0 %v136
    %611 = vmatpush1.msra.mxu0 %v135
    %612 = vmatprep.subr.mxu0 %v140
    %613 = vmatpush1.msra.mxu0 %v139
    %614 = vmatprep.subr.mxu0 %v144
    %615 = vmatpush1.msra.mxu0 %v143
    %616 = vmatprep.subr.mxu0 %v148
    %617 = vmatpush1.msra.mxu0 %v147
    %618 = vmatprep.subr.mxu0 %v152
    %619 = vmatpush1.msra.mxu0 %v151
    %620 = vmatprep.subr.mxu0 %v156
    %621 = vmatpush1.msra.mxu0 %v155
    %622 = vmatprep.subr.mxu0 %v160
    %623 = vmatpush1.msra.mxu0 %v159
    %624 = vmatprep.subr.mxu0 %v164
    %625 = vmatpush1.msra.mxu0 %v163
    %626 = vmatprep.subr.mxu0 %v168
    %627 = vmatpush1.msra.mxu0 %v167
    %628 = vmatprep.subr.mxu0 %v172
    %629 = vmatpush1.msra.mxu0 %v171
    %630 = vmatprep.subr.mxu0 0.0
    %631 = vmatpush1.msra.mxu0 0.0
    %632 = vmatprep.subr.mxu0 0.0
    %633 = vmatpush1.msra.mxu0 0.0
    %634 = vmatprep.subr.mxu0 0.0
    %635 = vmatpush1.msra.mxu0 0.0
    %636 = vmatprep.subr.mxu0 0.0
    %637 = vmatpush1.msra.mxu0 0.0
    %638 = vmatprep.subr.mxu0 0.0
    %639 = vmatpush1.msra.mxu0 0.0
    %640 = vmatprep.subr.mxu0 0.0
    %641 = vmatpush1.msra.mxu0 0.0
    %642 = vmatprep.subr.mxu0 0.0
    %643 = vmatpush1.msra.mxu0 0.0
    %644 = vmatprep.subr.mxu0 0.0
    %645 = vmatpush1.msra.mxu0 0.0
    %646 = vmatprep.subr.mxu0 0.0
    %647 = vmatpush1.msra.mxu0 0.0
    %648 = vmatprep.subr.mxu0 0.0
    %649 = vmatpush1.msra.mxu0 0.0
    %650 = vmatprep.subr.mxu0 0.0
    %651 = vmatpush1.msra.mxu0 0.0
    %652 = vmatprep.subr.mxu0 0.0
    %653 = vmatpush1.msra.mxu0 0.0
    %654 = vmatprep.subr.mxu0 0.0
    %655 = vmatpush1.msra.mxu0 0.0
    %656 = vmatprep.subr.mxu0 0.0
    %657 = vmatpush1.msra.mxu0 0.0
    %658 = vmatprep.subr.mxu0 0.0
    %659 = vmatpush1.msra.mxu0 0.0
    %660 = vmatprep.subr.mxu0 0.0
    %661 = vmatpush1.msra.mxu0 0.0
    %662 = vmatprep.mubr.f32.mxu0 0.0
    %663 = vmatmul.mubr.f32.gmra.mrb[0].mxu0 %v519
    %v664 = vpop.f32.mrb[0].mxu0
    %v665 = vadd.f32 0.0, %v664
    %v666 = vpop.f32.mrb[0].mxu0
    %v667 = vadd.f32 0.0, %v666
    %668 = vdwg.mxu0
    %v669 = vadd.f32 %v523, %v594
    %v670 = vadd.f32 %v524, %v596
    %v671 = vadd.f32 %v525, %v665
    %v672 = vadd.f32 %v526, %v667
    %v673 = vxor.u32 %v669, 2147483648
    %v674 = vmul.f32 %v673, 1.442695
    %v675 = vpow.pop %v674
    %v676 = vadd.f32 %v675, 1.0
    %v677 = vrcp.pop %v676
    %v678 = vmul.f32 1.0, %v677
    %v679 = vxor.u32 %v670, 2147483648
    %v680 = vmul.f32 %v679, 1.442695
    %v681 = vpow.pop %v680
    %v682 = vadd.f32 %v681, 1.0
    %v683 = vrcp.pop %v682
    %v684 = vmul.f32 1.0, %v683
    %v685 = vtanh.pop %v671
    %v686 = vxor.u32 %v672, 2147483648
    %v687 = vmul.f32 %v686, 1.442695
    %v688 = vpow.pop %v687
    %v689 = vadd.f32 %v688, 1.0
    %v690 = vrcp.pop %v689
    %v691 = vmul.f32 1.0, %v690
    %v692 = vmul.f32 %v684, %v517
    %v693 = vmul.f32 %v678, %v685
    %v694 = vadd.f32 %v692, %v693
    %v695 = vtanh.pop %v694
    %v696 = vmul.f32 %v691, %v695
    %s697 = smul.u32 3, 4
    %s698 = smul.addr %s697, 8
    %s699 = scalar_lea.vmem [#allocation4], %s698
    %v700 = vld [vmem:[%s699] sm:$0xff]
    %v701 = vld [vmem:[%s699 + $0x8] sm:$0xff]
    %v702 = vld [vmem:[%s699 + $0x10] sm:$0xff]
    %v703 = vld [vmem:[%s699 + $0x18] sm:$0xff]
    %704 = vmatprep.subr.mxu0 %v110
    %705 = vmatpush1.msra.mxu0 %v109
    %706 = vmatprep.subr.mxu0 %v114
    %707 = vmatpush1.msra.mxu0 %v113
    %708 = vmatprep.subr.mxu0 %v118
    %709 = vmatpush1.msra.mxu0 %v117
    %710 = vmatprep.subr.mxu0 %v122
    %711 = vmatpush1.msra.mxu0 %v121
    %712 = vmatprep.subr.mxu0 %v126
    %713 = vmatpush1.msra.mxu0 %v125
    %714 = vmatprep.subr.mxu0 %v130
    %715 = vmatpush1.msra.mxu0 %v129
    %716 = vmatprep.subr.mxu0 %v134
    %717 = vmatpush1.msra.mxu0 %v133
    %718 = vmatprep.subr.mxu0 %v138
    %719 = vmatpush1.msra.mxu0 %v137
    %720 = vmatprep.subr.mxu0 %v142
    %721 = vmatpush1.msra.mxu0 %v141
    %722 = vmatprep.subr.mxu0 %v146
    %723 = vmatpush1.msra.mxu0 %v145
    %724 = vmatprep.subr.mxu0 %v150
    %725 = vmatpush1.msra.mxu0 %v149
    %726 = vmatprep.subr.mxu0 %v154
    %727 = vmatpush1.msra.mxu0 %v153
    %728 = vmatprep.subr.mxu0 %v158
    %729 = vmatpush1.msra.mxu0 %v157
    %730 = vmatprep.subr.mxu0 %v162
    %731 = vmatpush1.msra.mxu0 %v161
    %732 = vmatprep.subr.mxu0 %v166
    %733 = vmatpush1.msra.mxu0 %v165
    %734 = vmatprep.subr.mxu0 %v170
    %735 = vmatpush1.msra.mxu0 %v169
    %736 = vmatprep.subr.mxu0 0.0
    %737 = vmatpush1.msra.mxu0 0.0
    %738 = vmatprep.subr.mxu0 0.0
    %739 = vmatpush1.msra.mxu0 0.0
    %740 = vmatprep.subr.mxu0 0.0
    %741 = vmatpush1.msra.mxu0 0.0
    %742 = vmatprep.subr.mxu0 0.0
    %743 = vmatpush1.msra.mxu0 0.0
    %744 = vmatprep.subr.mxu0 0.0
    %745 = vmatpush1.msra.mxu0 0.0
    %746 = vmatprep.subr.mxu0 0.0
    %747 = vmatpush1.msra.mxu0 0.0
    %748 = vmatprep.subr.mxu0 0.0
    %749 = vmatpush1.msra.mxu0 0.0
    %750 = vmatprep.subr.mxu0 0.0
    %751 = vmatpush1.msra.mxu0 0.0
    %752 = vmatprep.subr.mxu0 0.0
    %753 = vmatpush1.msra.mxu0 0.0
    %754 = vmatprep.subr.mxu0 0.0
    %755 = vmatpush1.msra.mxu0 0.0
    %756 = vmatprep.subr.mxu0 0.0
    %757 = vmatpush1.msra.mxu0 0.0
    %758 = vmatprep.subr.mxu0 0.0
    %759 = vmatpush1.msra.mxu0 0.0
    %760 = vmatprep.subr.mxu0 0.0
    %761 = vmatpush1.msra.mxu0 0.0
    %762 = vmatprep.subr.mxu0 0.0
    %763 = vmatpush1.msra.mxu0 0.0
    %764 = vmatprep.subr.mxu0 0.0
    %765 = vmatpush1.msra.mxu0 0.0
    %766 = vmatprep.subr.mxu0 0.0
    %767 = vmatpush1.msra.mxu0 0.0
    %768 = vmatprep.mubr.f32.mxu0 0.0
    %769 = vmatmul.mubr.f32.gmra.mrb[0].mxu0 %v696
    %v770 = vpop.f32.mrb[0].mxu0
    %v771 = vadd.f32 0.0, %v770
    %v772 = vpop.f32.mrb[0].mxu0
    %v773 = vadd.f32 0.0, %v772
    %774 = vdwg.mxu0
    %775 = vmatprep.subr.mxu0 %v112
    %776 = vmatpush1.msra.mxu0 %v111
    %777 = vmatprep.subr.mxu0 %v116
    %778 = vmatpush1.msra.mxu0 %v115
    %779 = vmatprep.subr.mxu0 %v120
    %780 = vmatpush1.msra.mxu0 %v119
    %781 = vmatprep.subr.mxu0 %v124
    %782 = vmatpush1.msra.mxu0 %v123
    %783 = vmatprep.subr.mxu0 %v128
    %784 = vmatpush1.msra.mxu0 %v127
    %785 = vmatprep.subr.mxu0 %v132
    %786 = vmatpush1.msra.mxu0 %v131
    %787 = vmatprep.subr.mxu0 %v136
    %788 = vmatpush1.msra.mxu0 %v135
    %789 = vmatprep.subr.mxu0 %v140
    %790 = vmatpush1.msra.mxu0 %v139
    %791 = vmatprep.subr.mxu0 %v144
    %792 = vmatpush1.msra.mxu0 %v143
    %793 = vmatprep.subr.mxu0 %v148
    %794 = vmatpush1.msra.mxu0 %v147
    %795 = vmatprep.subr.mxu0 %v152
    %796 = vmatpush1.msra.mxu0 %v151
    %797 = vmatprep.subr.mxu0 %v156
    %798 = vmatpush1.msra.mxu0 %v155
    %799 = vmatprep.subr.mxu0 %v160
    %800 = vmatpush1.msra.mxu0 %v159
    %801 = vmatprep.subr.mxu0 %v164
    %802 = vmatpush1.msra.mxu0 %v163
    %803 = vmatprep.subr.mxu0 %v168
    %804 = vmatpush1.msra.mxu0 %v167
    %805 = vmatprep.subr.mxu0 %v172
    %806 = vmatpush1.msra.mxu0 %v171
    %807 = vmatprep.subr.mxu0 0.0
    %808 = vmatpush1.msra.mxu0 0.0
    %809 = vmatprep.subr.mxu0 0.0
    %810 = vmatpush1.msra.mxu0 0.0
    %811 = vmatprep.subr.mxu0 0.0
    %812 = vmatpush1.msra.mxu0 0.0
    %813 = vmatprep.subr.mxu0 0.0
    %814 = vmatpush1.msra.mxu0 0.0
    %815 = vmatprep.subr.mxu0 0.0
    %816 = vmatpush1.msra.mxu0 0.0
    %817 = vmatprep.subr.mxu0 0.0
    %818 = vmatpush1.msra.mxu0 0.0
    %819 = vmatprep.subr.mxu0 0.0
    %820 = vmatpush1.msra.mxu0 0.0
    %821 = vmatprep.subr.mxu0 0.0
    %822 = vmatpush1.msra.mxu0 0.0
    %823 = vmatprep.subr.mxu0 0.0
    %824 = vmatpush1.msra.mxu0 0.0
    %825 = vmatprep.subr.mxu0 0.0
    %826 = vmatpush1.msra.mxu0 0.0
    %827 = vmatprep.subr.mxu0 0.0
    %828 = vmatpush1.msra.mxu0 0.0
    %829 = vmatprep.subr.mxu0 0.0
    %830 = vmatpush1.msra.mxu0 0.0
    %831 = vmatprep.subr.mxu0 0.0
    %832 = vmatpush1.msra.mxu0 0.0
    %833 = vmatprep.subr.mxu0 0.0
    %834 = vmatpush1.msra.mxu0 0.0
    %835 = vmatprep.subr.mxu0 0.0
    %836 = vmatpush1.msra.mxu0 0.0
    %837 = vmatprep.subr.mxu0 0.0
    %838 = vmatpush1.msra.mxu0 0.0
    %839 = vmatprep.mubr.f32.mxu0 0.0
    %840 = vmatmul.mubr.f32.gmra.mrb[0].mxu0 %v696
    %v841 = vpop.f32.mrb[0].mxu0
    %v842 = vadd.f32 0.0, %v841
    %v843 = vpop.f32.mrb[0].mxu0
    %v844 = vadd.f32 0.0, %v843
    %845 = vdwg.mxu0
    %v846 = vadd.f32 %v700, %v771
    %v847 = vadd.f32 %v701, %v773
    %v848 = vadd.f32 %v702, %v842
    %v849 = vadd.f32 %v703, %v844
    %v850 = vxor.u32 %v846, 2147483648
    %v851 = vmul.f32 %v850, 1.442695
    %v852 = vpow.pop %v851
    %v853 = vadd.f32 %v852, 1.0
    %v854 = vrcp.pop %v853
    %v855 = vmul.f32 1.0, %v854
    %v856 = vxor.u32 %v847, 2147483648
    %v857 = vmul.f32 %v856, 1.442695
    %v858 = vpow.pop %v857
    %v859 = vadd.f32 %v858, 1.0
    %v860 = vrcp.pop %v859
    %v861 = vmul.f32 1.0, %v860
    %v862 = vtanh.pop %v848
    %v863 = vxor.u32 %v849, 2147483648
    %v864 = vmul.f32 %v863, 1.442695
    %v865 = vpow.pop %v864
    %v866 = vadd.f32 %v865, 1.0
    %v867 = vrcp.pop %v866
    %v868 = vmul.f32 1.0, %v867
    %v869 = vmul.f32 %v861, %v694
    %v870 = vmul.f32 %v855, %v862
    %v871 = vadd.f32 %v869, %v870
    %v872 = vtanh.pop %v871
    %v873 = vmul.f32 %v868, %v872
    %s874 = smul.u32 4, 4
    %s875 = smul.addr %s874, 8
    %s876 = scalar_lea.vmem [#allocation4], %s875
    %v877 = vld [vmem:[%s876] sm:$0xff]
    %v878 = vld [vmem:[%s876 + $0x8] sm:$0xff]
    %v879 = vld [vmem:[%s876 + $0x10] sm:$0xff]
    %v880 = vld [vmem:[%s876 + $0x18] sm:$0xff]
    %881 = vmatprep.subr.mxu0 %v110
    %882 = vmatpush1.msra.mxu0 %v109
    %883 = vmatprep.subr.mxu0 %v114
    %884 = vmatpush1.msra.mxu0 %v113
    %885 = vmatprep.subr.mxu0 %v118
    %886 = vmatpush1.msra.mxu0 %v117
    %887 = vmatprep.subr.mxu0 %v122
    %888 = vmatpush1.msra.mxu0 %v121
    %889 = vmatprep.subr.mxu0 %v126
    %890 = vmatpush1.msra.mxu0 %v125
    %891 = vmatprep.subr.mxu0 %v130
    %892 = vmatpush1.msra.mxu0 %v129
    %893 = vmatprep.subr.mxu0 %v134
    %894 = vmatpush1.msra.mxu0 %v133
    %895 = vmatprep.subr.mxu0 %v138
    %896 = vmatpush1.msra.mxu0 %v137
    %897 = vmatprep.subr.mxu0 %v142
    %898 = vmatpush1.msra.mxu0 %v141
    %899 = vmatprep.subr.mxu0 %v146
    %900 = vmatpush1.msra.mxu0 %v145
    %901 = vmatprep.subr.mxu0 %v150
    %902 = vmatpush1.msra.mxu0 %v149
    %903 = vmatprep.subr.mxu0 %v154
    %904 = vmatpush1.msra.mxu0 %v153
    %905 = vmatprep.subr.mxu0 %v158
    %906 = vmatpush1.msra.mxu0 %v157
    %907 = vmatprep.subr.mxu0 %v162
    %908 = vmatpush1.msra.mxu0 %v161
    %909 = vmatprep.subr.mxu0 %v166
    %910 = vmatpush1.msra.mxu0 %v165
    %911 = vmatprep.subr.mxu0 %v170
    %912 = vmatpush1.msra.mxu0 %v169
    %913 = vmatprep.subr.mxu0 0.0
    %914 = vmatpush1.msra.mxu0 0.0
    %915 = vmatprep.subr.mxu0 0.0
    %916 = vmatpush1.msra.mxu0 0.0
    %917 = vmatprep.subr.mxu0 0.0
    %918 = vmatpush1.msra.mxu0 0.0
    %919 = vmatprep.subr.mxu0 0.0
    %920 = vmatpush1.msra.mxu0 0.0
    %921 = vmatprep.subr.mxu0 0.0
    %922 = vmatpush1.msra.mxu0 0.0
    %923 = vmatprep.subr.mxu0 0.0
    %924 = vmatpush1.msra.mxu0 0.0
    %925 = vmatprep.subr.mxu0 0.0
    %926 = vmatpush1.msra.mxu0 0.0
    %927 = vmatprep.subr.mxu0 0.0
    %928 = vmatpush1.msra.mxu0 0.0
    %929 = vmatprep.subr.mxu0 0.0
    %930 = vmatpush1.msra.mxu0 0.0
    %931 = vmatprep.subr.mxu0 0.0
    %932 = vmatpush1.msra.mxu0 0.0
    %933 = vmatprep.subr.mxu0 0.0
    %934 = vmatpush1.msra.mxu0 0.0
    %935 = vmatprep.subr.mxu0 0.0
    %936 = vmatpush1.msra.mxu0 0.0
    %937 = vmatprep.subr.mxu0 0.0
    %938 = vmatpush1.msra.mxu0 0.0
    %939 = vmatprep.subr.mxu0 0.0
    %940 = vmatpush1.msra.mxu0 0.0
    %941 = vmatprep.subr.mxu0 0.0
    %942 = vmatpush1.msra.mxu0 0.0
    %943 = vmatprep.subr.mxu0 0.0
    %944 = vmatpush1.msra.mxu0 0.0
    %945 = vmatprep.mubr.f32.mxu0 0.0
    %946 = vmatmul.mubr.f32.gmra.mrb[0].mxu0 %v873
    %v947 = vpop.f32.mrb[0].mxu0
    %v948 = vadd.f32 0.0, %v947
    %v949 = vpop.f32.mrb[0].mxu0
    %v950 = vadd.f32 0.0, %v949
    %951 = vdwg.mxu0
    %952 = vmatprep.subr.mxu0 %v112
    %953 = vmatpush1.msra.mxu0 %v111
    %954 = vmatprep.subr.mxu0 %v116
    %955 = vmatpush1.msra.mxu0 %v115
    %956 = vmatprep.subr.mxu0 %v120
    %957 = vmatpush1.msra.mxu0 %v119
    %958 = vmatprep.subr.mxu0 %v124
    %959 = vmatpush1.msra.mxu0 %v123
    %960 = vmatprep.subr.mxu0 %v128
    %961 = vmatpush1.msra.mxu0 %v127
    %962 = vmatprep.subr.mxu0 %v132
    %963 = vmatpush1.msra.mxu0 %v131
    %964 = vmatprep.subr.mxu0 %v136
    %965 = vmatpush1.msra.mxu0 %v135
    %966 = vmatprep.subr.mxu0 %v140
    %967 = vmatpush1.msra.mxu0 %v139
    %968 = vmatprep.subr.mxu0 %v144
    %969 = vmatpush1.msra.mxu0 %v143
    %970 = vmatprep.subr.mxu0 %v148
    %971 = vmatpush1.msra.mxu0 %v147
    %972 = vmatprep.subr.mxu0 %v152
    %973 = vmatpush1.msra.mxu0 %v151
    %974 = vmatprep.subr.mxu0 %v156
    %975 = vmatpush1.msra.mxu0 %v155
    %976 = vmatprep.subr.mxu0 %v160
    %977 = vmatpush1.msra.mxu0 %v159
    %978 = vmatprep.subr.mxu0 %v164
    %979 = vmatpush1.msra.mxu0 %v163
    %980 = vmatprep.subr.mxu0 %v168
    %981 = vmatpush1.msra.mxu0 %v167
    %982 = vmatprep.subr.mxu0 %v172
    %983 = vmatpush1.msra.mxu0 %v171
    %984 = vmatprep.subr.mxu0 0.0
    %985 = vmatpush1.msra.mxu0 0.0
    %986 = vmatprep.subr.mxu0 0.0
    %987 = vmatpush1.msra.mxu0 0.0
    %988 = vmatprep.subr.mxu0 0.0
    %989 = vmatpush1.msra.mxu0 0.0
    %990 = vmatprep.subr.mxu0 0.0
    %991 = vmatpush1.msra.mxu0 0.0
    %992 = vmatprep.subr.mxu0 0.0
    %993 = vmatpush1.msra.mxu0 0.0
    %994 = vmatprep.subr.mxu0 0.0
    %995 = vmatpush1.msra.mxu0 0.0
    %996 = vmatprep.subr.mxu0 0.0
    %997 = vmatpush1.msra.mxu0 0.0
    %998 = vmatprep.subr.mxu0 0.0
    %999 = vmatpush1.msra.mxu0 0.0
    %1000 = vmatprep.subr.mxu0 0.0
    %1001 = vmatpush1.msra.mxu0 0.0
    %1002 = vmatprep.subr.mxu0 0.0
    %1003 = vmatpush1.msra.mxu0 0.0
    %1004 = vmatprep.subr.mxu0 0.0
    %1005 = vmatpush1.msra.mxu0 0.0
    %1006 = vmatprep.subr.mxu0 0.0
    %1007 = vmatpush1.msra.mxu0 0.0
    %1008 = vmatprep.subr.mxu0 0.0
    %1009 = vmatpush1.msra.mxu0 0.0
    %1010 = vmatprep.subr.mxu0 0.0
    %1011 = vmatpush1.msra.mxu0 0.0
    %1012 = vmatprep.subr.mxu0 0.0
    %1013 = vmatpush1.msra.mxu0 0.0
    %1014 = vmatprep.subr.mxu0 0.0
    %1015 = vmatpush1.msra.mxu0 0.0
    %1016 = vmatprep.mubr.f32.mxu0 0.0
    %1017 = vmatmul.mubr.f32.gmra.mrb[0].mxu0 %v873
    %v1018 = vpop.f32.mrb[0].mxu0
    %v1019 = vadd.f32 0.0, %v1018
    %v1020 = vpop.f32.mrb[0].mxu0
    %v1021 = vadd.f32 0.0, %v1020
    %1022 = vdwg.mxu0
    %v1023 = vadd.f32 %v877, %v948
    %v1024 = vadd.f32 %v878, %v950
    %v1025 = vadd.f32 %v879, %v1019
    %v1026 = vadd.f32 %v880, %v1021
    %v1027 = vxor.u32 %v1023, 2147483648
    %v1028 = vmul.f32 %v1027, 1.442695
    %v1029 = vpow.pop %v1028
    %v1030 = vadd.f32 %v1029, 1.0
    %v1031 = vrcp.pop %v1030
    %v1032 = vmul.f32 1.0, %v1031
    %v1033 = vxor.u32 %v1024, 2147483648
    %v1034 = vmul.f32 %v1033, 1.442695
    %v1035 = vpow.pop %v1034
    %v1036 = vadd.f32 %v1035, 1.0
    %v1037 = vrcp.pop %v1036
    %v1038 = vmul.f32 1.0, %v1037
    %v1039 = vtanh.pop %v1025
    %v1040 = vxor.u32 %v1026, 2147483648
    %v1041 = vmul.f32 %v1040, 1.442695
    %v1042 = vpow.pop %v1041
    %v1043 = vadd.f32 %v1042, 1.0
    %v1044 = vrcp.pop %v1043
    %v1045 = vmul.f32 1.0, %v1044
    %v1046 = vmul.f32 %v1038, %v871
    %v1047 = vmul.f32 %v1032, %v1039
    %v1048 = vadd.f32 %v1046, %v1047
    %v1049 = vtanh.pop %v1048
    %v1050 = vmul.f32 %v1045, %v1049
    %s1051 = smul.u32 5, 4
    %s1052 = smul.addr %s1051, 8
    %s1053 = scalar_lea.vmem [#allocation4], %s1052
    %v1054 = vld [vmem:[%s1053] sm:$0xff]
    %v1055 = vld [vmem:[%s1053 + $0x8] sm:$0xff]
    %v1056 = vld [vmem:[%s1053 + $0x10] sm:$0xff]
    %v1057 = vld [vmem:[%s1053 + $0x18] sm:$0xff]
    %1058 = vmatprep.subr.mxu0 %v110
    %1059 = vmatpush1.msra.mxu0 %v109
    %1060 = vmatprep.subr.mxu0 %v114
    %1061 = vmatpush1.msra.mxu0 %v113
    %1062 = vmatprep.subr.mxu0 %v118
    %1063 = vmatpush1.msra.mxu0 %v117
    %1064 = vmatprep.subr.mxu0 %v122
    %1065 = vmatpush1.msra.mxu0 %v121
    %1066 = vmatprep.subr.mxu0 %v126
    %1067 = vmatpush1.msra.mxu0 %v125
    %1068 = vmatprep.subr.mxu0 %v130
    %1069 = vmatpush1.msra.mxu0 %v129
    %1070 = vmatprep.subr.mxu0 %v134
    %1071 = vmatpush1.msra.mxu0 %v133
    %1072 = vmatprep.subr.mxu0 %v138
    %1073 = vmatpush1.msra.mxu0 %v137
    %1074 = vmatprep.subr.mxu0 %v142
    %1075 = vmatpush1.msra.mxu0 %v141
    %1076 = vmatprep.subr.mxu0 %v146
    %1077 = vmatpush1.msra.mxu0 %v145
    %1078 = vmatprep.subr.mxu0 %v150
    %1079 = vmatpush1.msra.mxu0 %v149
    %1080 = vmatprep.subr.mxu0 %v154
    %1081 = vmatpush1.msra.mxu0 %v153
    %1082 = vmatprep.subr.mxu0 %v158
    %1083 = vmatpush1.msra.mxu0 %v157
    %1084 = vmatprep.subr.mxu0 %v162
    %1085 = vmatpush1.msra.mxu0 %v161
    %1086 = vmatprep.subr.mxu0 %v166
    %1087 = vmatpush1.msra.mxu0 %v165
    %1088 = vmatprep.subr.mxu0 %v170
    %1089 = vmatpush1.msra.mxu0 %v169
    %1090 = vmatprep.subr.mxu0 0.0
    %1091 = vmatpush1.msra.mxu0 0.0
    %1092 = vmatprep.subr.mxu0 0.0
    %1093 = vmatpush1.msra.mxu0 0.0
    %1094 = vmatprep.subr.mxu0 0.0
    %1095 = vmatpush1.msra.mxu0 0.0
    %1096 = vmatprep.subr.mxu0 0.0
    %1097 = vmatpush1.msra.mxu0 0.0
    %1098 = vmatprep.subr.mxu0 0.0
    %1099 = vmatpush1.msra.mxu0 0.0
    %1100 = vmatprep.subr.mxu0 0.0
    %1101 = vmatpush1.msra.mxu0 0.0
    %1102 = vmatprep.subr.mxu0 0.0
    %1103 = vmatpush1.msra.mxu0 0.0
    %1104 = vmatprep.subr.mxu0 0.0
    %1105 = vmatpush1.msra.mxu0 0.0
    %1106 = vmatprep.subr.mxu0 0.0
    %1107 = vmatpush1.msra.mxu0 0.0
    %1108 = vmatprep.subr.mxu0 0.0
    %1109 = vmatpush1.msra.mxu0 0.0
    %1110 = vmatprep.subr.mxu0 0.0
    %1111 = vmatpush1.msra.mxu0 0.0
    %1112 = vmatprep.subr.mxu0 0.0
    %1113 = vmatpush1.msra.mxu0 0.0
    %1114 = vmatprep.subr.mxu0 0.0
    %1115 = vmatpush1.msra.mxu0 0.0
    %1116 = vmatprep.subr.mxu0 0.0
    %1117 = vmatpush1.msra.mxu0 0.0
    %1118 = vmatprep.subr.mxu0 0.0
    %1119 = vmatpush1.msra.mxu0 0.0
    %1120 = vmatprep.subr.mxu0 0.0
    %1121 = vmatpush1.msra.mxu0 0.0
    %1122 = vmatprep.mubr.f32.mxu0 0.0
    %1123 = vmatmul.mubr.f32.gmra.mrb[0].mxu0 %v1050
    %v1124 = vpop.f32.mrb[0].mxu0
    %v1125 = vadd.f32 0.0, %v1124
    %v1126 = vpop.f32.mrb[0].mxu0
    %v1127 = vadd.f32 0.0, %v1126
    %1128 = vdwg.mxu0
    %1129 = vmatprep.subr.mxu0 %v112
    %1130 = vmatpush1.msra.mxu0 %v111
    %1131 = vmatprep.subr.mxu0 %v116
    %1132 = vmatpush1.msra.mxu0 %v115
    %1133 = vmatprep.subr.mxu0 %v120
    %1134 = vmatpush1.msra.mxu0 %v119
    %1135 = vmatprep.subr.mxu0 %v124
    %1136 = vmatpush1.msra.mxu0 %v123
    %1137 = vmatprep.subr.mxu0 %v128
    %1138 = vmatpush1.msra.mxu0 %v127
    %1139 = vmatprep.subr.mxu0 %v132
    %1140 = vmatpush1.msra.mxu0 %v131
    %1141 = vmatprep.subr.mxu0 %v136
    %1142 = vmatpush1.msra.mxu0 %v135
    %1143 = vmatprep.subr.mxu0 %v140
    %1144 = vmatpush1.msra.mxu0 %v139
    %1145 = vmatprep.subr.mxu0 %v144
    %1146 = vmatpush1.msra.mxu0 %v143
    %1147 = vmatprep.subr.mxu0 %v148
    %1148 = vmatpush1.msra.mxu0 %v147
    %1149 = vmatprep.subr.mxu0 %v152
    %1150 = vmatpush1.msra.mxu0 %v151
    %1151 = vmatprep.subr.mxu0 %v156
    %1152 = vmatpush1.msra.mxu0 %v155
    %1153 = vmatprep.subr.mxu0 %v160
    %1154 = vmatpush1.msra.mxu0 %v159
    %1155 = vmatprep.subr.mxu0 %v164
    %1156 = vmatpush1.msra.mxu0 %v163
    %1157 = vmatprep.subr.mxu0 %v168
    %1158 = vmatpush1.msra.mxu0 %v167
    %1159 = vmatprep.subr.mxu0 %v172
    %1160 = vmatpush1.msra.mxu0 %v171
    %1161 = vmatprep.subr.mxu0 0.0
    %1162 = vmatpush1.msra.mxu0 0.0
    %1163 = vmatprep.subr.mxu0 0.0
    %1164 = vmatpush1.msra.mxu0 0.0
    %1165 = vmatprep.subr.mxu0 0.0
    %1166 = vmatpush1.msra.mxu0 0.0
    %1167 = vmatprep.subr.mxu0 0.0
    %1168 = vmatpush1.msra.mxu0 0.0
    %1169 = vmatprep.subr.mxu0 0.0
    %1170 = vmatpush1.msra.mxu0 0.0
    %1171 = vmatprep.subr.mxu0 0.0
    %1172 = vmatpush1.msra.mxu0 0.0
    %1173 = vmatprep.subr.mxu0 0.0
    %1174 = vmatpush1.msra.mxu0 0.0
    %1175 = vmatprep.subr.mxu0 0.0
    %1176 = vmatpush1.msra.mxu0 0.0
    %1177 = vmatprep.subr.mxu0 0.0
    %1178 = vmatpush1.msra.mxu0 0.0
    %1179 = vmatprep.subr.mxu0 0.0
    %1180 = vmatpush1.msra.mxu0 0.0
    %1181 = vmatprep.subr.mxu0 0.0
    %1182 = vmatpush1.msra.mxu0 0.0
    %1183 = vmatprep.subr.mxu0 0.0
    %1184 = vmatpush1.msra.mxu0 0.0
    %1185 = vmatprep.subr.mxu0 0.0
    %1186 = vmatpush1.msra.mxu0 0.0
    %1187 = vmatprep.subr.mxu0 0.0
    %1188 = vmatpush1.msra.mxu0 0.0
    %1189 = vmatprep.subr.mxu0 0.0
    %1190 = vmatpush1.msra.mxu0 0.0
    %1191 = vmatprep.subr.mxu0 0.0
    %1192 = vmatpush1.msra.mxu0 0.0
    %1193 = vmatprep.mubr.f32.mxu0 0.0
    %1194 = vmatmul.mubr.f32.gmra.mrb[0].mxu0 %v1050
    %v1195 = vpop.f32.mrb[0].mxu0
    %v1196 = vadd.f32 0.0, %v1195
    %v1197 = vpop.f32.mrb[0].mxu0
    %v1198 = vadd.f32 0.0, %v1197
    %1199 = vdwg.mxu0
    %v1200 = vadd.f32 %v1054, %v1125
    %v1201 = vadd.f32 %v1055, %v1127
    %v1202 = vadd.f32 %v1056, %v1196
    %v1203 = vadd.f32 %v1057, %v1198
    %v1204 = vxor.u32 %v1200, 2147483648
    %v1205 = vmul.f32 %v1204, 1.442695
    %v1206 = vpow.pop %v1205
    %v1207 = vadd.f32 %v1206, 1.0
    %v1208 = vrcp.pop %v1207
    %v1209 = vmul.f32 1.0, %v1208
    %v1210 = vxor.u32 %v1201, 2147483648
    %v1211 = vmul.f32 %v1210, 1.442695
    %v1212 = vpow.pop %v1211
    %v1213 = vadd.f32 %v1212, 1.0
    %v1214 = vrcp.pop %v1213
    %v1215 = vmul.f32 1.0, %v1214
    %v1216 = vtanh.pop %v1202
    %v1217 = vxor.u32 %v1203, 2147483648
    %v1218 = vmul.f32 %v1217, 1.442695
    %v1219 = vpow.pop %v1218
    %v1220 = vadd.f32 %v1219, 1.0
    %v1221 = vrcp.pop %v1220
    %v1222 = vmul.f32 1.0, %v1221
    %v1223 = vmul.f32 %v1215, %v1048
    %v1224 = vmul.f32 %v1209, %v1216
    %v1225 = vadd.f32 %v1223, %v1224
    %v1226 = vtanh.pop %v1225
    %v1227 = vmul.f32 %v1222, %v1226
    %s1228 = smul.u32 6, 4
    %s1229 = smul.addr %s1228, 8
    %s1230 = scalar_lea.vmem [#allocation4], %s1229
    %v1231 = vld [vmem:[%s1230] sm:$0xff]
    %v1232 = vld [vmem:[%s1230 + $0x8] sm:$0xff]
    %v1233 = vld [vmem:[%s1230 + $0x10] sm:$0xff]
    %v1234 = vld [vmem:[%s1230 + $0x18] sm:$0xff]
    %1235 = vmatprep.subr.mxu0 %v110
    %1236 = vmatpush1.msra.mxu0 %v109
    %1237 = vmatprep.subr.mxu0 %v114
    %1238 = vmatpush1.msra.mxu0 %v113
    %1239 = vmatprep.subr.mxu0 %v118
    %1240 = vmatpush1.msra.mxu0 %v117
    %1241 = vmatprep.subr.mxu0 %v122
    %1242 = vmatpush1.msra.mxu0 %v121
    %1243 = vmatprep.subr.mxu0 %v126
    %1244 = vmatpush1.msra.mxu0 %v125
    %1245 = vmatprep.subr.mxu0 %v130
    %1246 = vmatpush1.msra.mxu0 %v129
    %1247 = vmatprep.subr.mxu0 %v134
    %1248 = vmatpush1.msra.mxu0 %v133
    %1249 = vmatprep.subr.mxu0 %v138
    %1250 = vmatpush1.msra.mxu0 %v137
    %1251 = vmatprep.subr.mxu0 %v142
    %1252 = vmatpush1.msra.mxu0 %v141
    %1253 = vmatprep.subr.mxu0 %v146
    %1254 = vmatpush1.msra.mxu0 %v145
    %1255 = vmatprep.subr.mxu0 %v150
    %1256 = vmatpush1.msra.mxu0 %v149
    %1257 = vmatprep.subr.mxu0 %v154
    %1258 = vmatpush1.msra.mxu0 %v153
    %1259 = vmatprep.subr.mxu0 %v158
    %1260 = vmatpush1.msra.mxu0 %v157
    %1261 = vmatprep.subr.mxu0 %v162
    %1262 = vmatpush1.msra.mxu0 %v161
    %1263 = vmatprep.subr.mxu0 %v166
    %1264 = vmatpush1.msra.mxu0 %v165
    %1265 = vmatprep.subr.mxu0 %v170
    %1266 = vmatpush1.msra.mxu0 %v169
    %1267 = vmatprep.subr.mxu0 0.0
    %1268 = vmatpush1.msra.mxu0 0.0
    %1269 = vmatprep.subr.mxu0 0.0
    %1270 = vmatpush1.msra.mxu0 0.0
    %1271 = vmatprep.subr.mxu0 0.0
    %1272 = vmatpush1.msra.mxu0 0.0
    %1273 = vmatprep.subr.mxu0 0.0
    %1274 = vmatpush1.msra.mxu0 0.0
    %1275 = vmatprep.subr.mxu0 0.0
    %1276 = vmatpush1.msra.mxu0 0.0
    %1277 = vmatprep.subr.mxu0 0.0
    %1278 = vmatpush1.msra.mxu0 0.0
    %1279 = vmatprep.subr.mxu0 0.0
    %1280 = vmatpush1.msra.mxu0 0.0
    %1281 = vmatprep.subr.mxu0 0.0
    %1282 = vmatpush1.msra.mxu0 0.0
    %1283 = vmatprep.subr.mxu0 0.0
    %1284 = vmatpush1.msra.mxu0 0.0
    %1285 = vmatprep.subr.mxu0 0.0
    %1286 = vmatpush1.msra.mxu0 0.0
    %1287 = vmatprep.subr.mxu0 0.0
    %1288 = vmatpush1.msra.mxu0 0.0
    %1289 = vmatprep.subr.mxu0 0.0
    %1290 = vmatpush1.msra.mxu0 0.0
    %1291 = vmatprep.subr.mxu0 0.0
    %1292 = vmatpush1.msra.mxu0 0.0
    %1293 = vmatprep.subr.mxu0 0.0
    %1294 = vmatpush1.msra.mxu0 0.0
    %1295 = vmatprep.subr.mxu0 0.0
    %1296 = vmatpush1.msra.mxu0 0.0
    %1297 = vmatprep.subr.mxu0 0.0
    %1298 = vmatpush1.msra.mxu0 0.0
    %1299 = vmatprep.mubr.f32.mxu0 0.0
    %1300 = vmatmul.mubr.f32.gmra.mrb[0].mxu0 %v1227
    %v1301 = vpop.f32.mrb[0].mxu0
    %v1302 = vadd.f32 0.0, %v1301
    %v1303 = vpop.f32.mrb[0].mxu0
    %v1304 = vadd.f32 0.0, %v1303
    %1305 = vdwg.mxu0
    %1306 = vmatprep.subr.mxu0 %v112
    %1307 = vmatpush1.msra.mxu0 %v111
    %1308 = vmatprep.subr.mxu0 %v116
    %1309 = vmatpush1.msra.mxu0 %v115
    %1310 = vmatprep.subr.mxu0 %v120
    %1311 = vmatpush1.msra.mxu0 %v119
    %1312 = vmatprep.subr.mxu0 %v124
    %1313 = vmatpush1.msra.mxu0 %v123
    %1314 = vmatprep.subr.mxu0 %v128
    %1315 = vmatpush1.msra.mxu0 %v127
    %1316 = vmatprep.subr.mxu0 %v132
    %1317 = vmatpush1.msra.mxu0 %v131
    %1318 = vmatprep.subr.mxu0 %v136
    %1319 = vmatpush1.msra.mxu0 %v135
    %1320 = vmatprep.subr.mxu0 %v140
    %1321 = vmatpush1.msra.mxu0 %v139
    %1322 = vmatprep.subr.mxu0 %v144
    %1323 = vmatpush1.msra.mxu0 %v143
    %1324 = vmatprep.subr.mxu0 %v148
    %1325 = vmatpush1.msra.mxu0 %v147
    %1326 = vmatprep.subr.mxu0 %v152
    %1327 = vmatpush1.msra.mxu0 %v151
    %1328 = vmatprep.subr.mxu0 %v156
    %1329 = vmatpush1.msra.mxu0 %v155
    %1330 = vmatprep.subr.mxu0 %v160
    %1331 = vmatpush1.msra.mxu0 %v159
    %1332 = vmatprep.subr.mxu0 %v164
    %1333 = vmatpush1.msra.mxu0 %v163
    %1334 = vmatprep.subr.mxu0 %v168
    %1335 = vmatpush1.msra.mxu0 %v167
    %1336 = vmatprep.subr.mxu0 %v172
    %1337 = vmatpush1.msra.mxu0 %v171
    %1338 = vmatprep.subr.mxu0 0.0
    %1339 = vmatpush1.msra.mxu0 0.0
    %1340 = vmatprep.subr.mxu0 0.0
    %1341 = vmatpush1.msra.mxu0 0.0
    %1342 = vmatprep.subr.mxu0 0.0
    %1343 = vmatpush1.msra.mxu0 0.0
    %1344 = vmatprep.subr.mxu0 0.0
    %1345 = vmatpush1.msra.mxu0 0.0
    %1346 = vmatprep.subr.mxu0 0.0
    %1347 = vmatpush1.msra.mxu0 0.0
    %1348 = vmatprep.subr.mxu0 0.0
    %1349 = vmatpush1.msra.mxu0 0.0
    %1350 = vmatprep.subr.mxu0 0.0
    %1351 = vmatpush1.msra.mxu0 0.0
    %1352 = vmatprep.subr.mxu0 0.0
    %1353 = vmatpush1.msra.mxu0 0.0
    %1354 = vmatprep.subr.mxu0 0.0
    %1355 = vmatpush1.msra.mxu0 0.0
    %1356 = vmatprep.subr.mxu0 0.0
    %1357 = vmatpush1.msra.mxu0 0.0
    %1358 = vmatprep.subr.mxu0 0.0
    %1359 = vmatpush1.msra.mxu0 0.0
    %1360 = vmatprep.subr.mxu0 0.0
    %1361 = vmatpush1.msra.mxu0 0.0
    %1362 = vmatprep.subr.mxu0 0.0
    %1363 = vmatpush1.msra.mxu0 0.0
    %1364 = vmatprep.subr.mxu0 0.0
    %1365 = vmatpush1.msra.mxu0 0.0
    %1366 = vmatprep.subr.mxu0 0.0
    %1367 = vmatpush1.msra.mxu0 0.0
    %1368 = vmatprep.subr.mxu0 0.0
    %1369 = vmatpush1.msra.mxu0 0.0
    %1370 = vmatprep.mubr.f32.mxu0 0.0
    %1371 = vmatmul.mubr.f32.gmra.mrb[0].mxu0 %v1227
    %v1372 = vpop.f32.mrb[0].mxu0
    %v1373 = vadd.f32 0.0, %v1372
    %v1374 = vpop.f32.mrb[0].mxu0
    %v1375 = vadd.f32 0.0, %v1374
    %1376 = vdwg.mxu0
    %v1377 = vadd.f32 %v1231, %v1302
    %v1378 = vadd.f32 %v1232, %v1304
    %v1379 = vadd.f32 %v1233, %v1373
    %v1380 = vadd.f32 %v1234, %v1375
    %v1381 = vxor.u32 %v1377, 2147483648
    %v1382 = vmul.f32 %v1381, 1.442695
    %v1383 = vpow.pop %v1382
    %v1384 = vadd.f32 %v1383, 1.0
    %v1385 = vrcp.pop %v1384
    %v1386 = vmul.f32 1.0, %v1385
    %v1387 = vxor.u32 %v1378, 2147483648
    %v1388 = vmul.f32 %v1387, 1.442695
    %v1389 = vpow.pop %v1388
    %v1390 = vadd.f32 %v1389, 1.0
    %v1391 = vrcp.pop %v1390
    %v1392 = vmul.f32 1.0, %v1391
    %v1393 = vtanh.pop %v1379
    %v1394 = vxor.u32 %v1380, 2147483648
    %v1395 = vmul.f32 %v1394, 1.442695
    %v1396 = vpow.pop %v1395
    %v1397 = vadd.f32 %v1396, 1.0
    %v1398 = vrcp.pop %v1397
    %v1399 = vmul.f32 1.0, %v1398
    %v1400 = vmul.f32 %v1392, %v1225
    %v1401 = vmul.f32 %v1386, %v1393
    %v1402 = vadd.f32 %v1400, %v1401
    %v1403 = vtanh.pop %v1402
    %v1404 = vmul.f32 %v1399, %v1403
    %s1405 = smul.u32 7, 4
    %s1406 = smul.addr %s1405, 8
    %s1407 = scalar_lea.vmem [#allocation4], %s1406
    %v1408 = vld [vmem:[%s1407] sm:$0xff]
    %v1409 = vld [vmem:[%s1407 + $0x8] sm:$0xff]
    %v1410 = vld [vmem:[%s1407 + $0x10] sm:$0xff]
    %v1411 = vld [vmem:[%s1407 + $0x18] sm:$0xff]
    %1412 = vmatprep.subr.mxu0 %v110
    %1413 = vmatpush1.msra.mxu0 %v109
    %1414 = vmatprep.subr.mxu0 %v114
    %1415 = vmatpush1.msra.mxu0 %v113
    %1416 = vmatprep.subr.mxu0 %v118
    %1417 = vmatpush1.msra.mxu0 %v117
    %1418 = vmatprep.subr.mxu0 %v122
    %1419 = vmatpush1.msra.mxu0 %v121
    %1420 = vmatprep.subr.mxu0 %v126
    %1421 = vmatpush1.msra.mxu0 %v125
    %1422 = vmatprep.subr.mxu0 %v130
    %1423 = vmatpush1.msra.mxu0 %v129
    %1424 = vmatprep.subr.mxu0 %v134
    %1425 = vmatpush1.msra.mxu0 %v133
    %1426 = vmatprep.subr.mxu0 %v138
    %1427 = vmatpush1.msra.mxu0 %v137
    %1428 = vmatprep.subr.mxu0 %v142
    %1429 = vmatpush1.msra.mxu0 %v141
    %1430 = vmatprep.subr.mxu0 %v146
    %1431 = vmatpush1.msra.mxu0 %v145
    %1432 = vmatprep.subr.mxu0 %v150
    %1433 = vmatpush1.msra.mxu0 %v149
    %1434 = vmatprep.subr.mxu0 %v154
    %1435 = vmatpush1.msra.mxu0 %v153
    %1436 = vmatprep.subr.mxu0 %v158
    %1437 = vmatpush1.msra.mxu0 %v157
    %1438 = vmatprep.subr.mxu0 %v162
    %1439 = vmatpush1.msra.mxu0 %v161
    %1440 = vmatprep.subr.mxu0 %v166
    %1441 = vmatpush1.msra.mxu0 %v165
    %1442 = vmatprep.subr.mxu0 %v170
    %1443 = vmatpush1.msra.mxu0 %v169
    %1444 = vmatprep.subr.mxu0 0.0
    %1445 = vmatpush1.msra.mxu0 0.0
    %1446 = vmatprep.subr.mxu0 0.0
    %1447 = vmatpush1.msra.mxu0 0.0
    %1448 = vmatprep.subr.mxu0 0.0
    %1449 = vmatpush1.msra.mxu0 0.0
    %1450 = vmatprep.subr.mxu0 0.0
    %1451 = vmatpush1.msra.mxu0 0.0
    %1452 = vmatprep.subr.mxu0 0.0
    %1453 = vmatpush1.msra.mxu0 0.0
    %1454 = vmatprep.subr.mxu0 0.0
    %1455 = vmatpush1.msra.mxu0 0.0
    %1456 = vmatprep.subr.mxu0 0.0
    %1457 = vmatpush1.msra.mxu0 0.0
    %1458 = vmatprep.subr.mxu0 0.0
    %1459 = vmatpush1.msra.mxu0 0.0
    %1460 = vmatprep.subr.mxu0 0.0
    %1461 = vmatpush1.msra.mxu0 0.0
    %1462 = vmatprep.subr.mxu0 0.0
    %1463 = vmatpush1.msra.mxu0 0.0
    %1464 = vmatprep.subr.mxu0 0.0
    %1465 = vmatpush1.msra.mxu0 0.0
    %1466 = vmatprep.subr.mxu0 0.0
    %1467 = vmatpush1.msra.mxu0 0.0
    %1468 = vmatprep.subr.mxu0 0.0
    %1469 = vmatpush1.msra.mxu0 0.0
    %1470 = vmatprep.subr.mxu0 0.0
    %1471 = vmatpush1.msra.mxu0 0.0
    %1472 = vmatprep.subr.mxu0 0.0
    %1473 = vmatpush1.msra.mxu0 0.0
    %1474 = vmatprep.subr.mxu0 0.0
    %1475 = vmatpush1.msra.mxu0 0.0
    %1476 = vmatprep.mubr.f32.mxu0 0.0
    %1477 = vmatmul.mubr.f32.gmra.mrb[0].mxu0 %v1404
    %v1478 = vpop.f32.mrb[0].mxu0
    %v1479 = vadd.f32 0.0, %v1478
    %v1480 = vpop.f32.mrb[0].mxu0
    %v1481 = vadd.f32 0.0, %v1480
    %1482 = vdwg.mxu0
    %1483 = vmatprep.subr.mxu0 %v112
    %1484 = vmatpush1.msra.mxu0 %v111
    %1485 = vmatprep.subr.mxu0 %v116
    %1486 = vmatpush1.msra.mxu0 %v115
    %1487 = vmatprep.subr.mxu0 %v120
    %1488 = vmatpush1.msra.mxu0 %v119
    %1489 = vmatprep.subr.mxu0 %v124
    %1490 = vmatpush1.msra.mxu0 %v123
    %1491 = vmatprep.subr.mxu0 %v128
    %1492 = vmatpush1.msra.mxu0 %v127
    %1493 = vmatprep.subr.mxu0 %v132
    %1494 = vmatpush1.msra.mxu0 %v131
    %1495 = vmatprep.subr.mxu0 %v136
    %1496 = vmatpush1.msra.mxu0 %v135
    %1497 = vmatprep.subr.mxu0 %v140
    %1498 = vmatpush1.msra.mxu0 %v139
    %1499 = vmatprep.subr.mxu0 %v144
    %1500 = vmatpush1.msra.mxu0 %v143
    %1501 = vmatprep.subr.mxu0 %v148
    %1502 = vmatpush1.msra.mxu0 %v147
    %1503 = vmatprep.subr.mxu0 %v152
    %1504 = vmatpush1.msra.mxu0 %v151
    %1505 = vmatprep.subr.mxu0 %v156
    %1506 = vmatpush1.msra.mxu0 %v155
    %1507 = vmatprep.subr.mxu0 %v160
    %1508 = vmatpush1.msra.mxu0 %v159
    %1509 = vmatprep.subr.mxu0 %v164
    %1510 = vmatpush1.msra.mxu0 %v163
    %1511 = vmatprep.subr.mxu0 %v168
    %1512 = vmatpush1.msra.mxu0 %v167
    %1513 = vmatprep.subr.mxu0 %v172
    %1514 = vmatpush1.msra.mxu0 %v171
    %1515 = vmatprep.subr.mxu0 0.0
    %1516 = vmatpush1.msra.mxu0 0.0
    %1517 = vmatprep.subr.mxu0 0.0
    %1518 = vmatpush1.msra.mxu0 0.0
    %1519 = vmatprep.subr.mxu0 0.0
    %1520 = vmatpush1.msra.mxu0 0.0
    %1521 = vmatprep.subr.mxu0 0.0
    %1522 = vmatpush1.msra.mxu0 0.0
    %1523 = vmatprep.subr.mxu0 0.0
    %1524 = vmatpush1.msra.mxu0 0.0
    %1525 = vmatprep.subr.mxu0 0.0
    %1526 = vmatpush1.msra.mxu0 0.0
    %1527 = vmatprep.subr.mxu0 0.0
    %1528 = vmatpush1.msra.mxu0 0.0
    %1529 = vmatprep.subr.mxu0 0.0
    %1530 = vmatpush1.msra.mxu0 0.0
    %1531 = vmatprep.subr.mxu0 0.0
    %1532 = vmatpush1.msra.mxu0 0.0
    %1533 = vmatprep.subr.mxu0 0.0
    %1534 = vmatpush1.msra.mxu0 0.0
    %1535 = vmatprep.subr.mxu0 0.0
    %1536 = vmatpush1.msra.mxu0 0.0
    %1537 = vmatprep.subr.mxu0 0.0
    %1538 = vmatpush1.msra.mxu0 0.0
    %1539 = vmatprep.subr.mxu0 0.0
    %1540 = vmatpush1.msra.mxu0 0.0
    %1541 = vmatprep.subr.mxu0 0.0
    %1542 = vmatpush1.msra.mxu0 0.0
    %1543 = vmatprep.subr.mxu0 0.0
    %1544 = vmatpush1.msra.mxu0 0.0
    %1545 = vmatprep.subr.mxu0 0.0
    %1546 = vmatpush1.msra.mxu0 0.0
    %1547 = vmatprep.mubr.f32.mxu0 0.0
    %1548 = vmatmul.mubr.f32.gmra.mrb[0].mxu0 %v1404
    %v1549 = vpop.f32.mrb[0].mxu0
    %v1550 = vadd.f32 0.0, %v1549
    %v1551 = vpop.f32.mrb[0].mxu0
    %v1552 = vadd.f32 0.0, %v1551
    %1553 = vdwg.mxu0
    %v1554 = vadd.f32 %v1408, %v1479
    %v1555 = vadd.f32 %v1409, %v1481
    %v1556 = vadd.f32 %v1410, %v1550
    %v1557 = vadd.f32 %v1411, %v1552
    %v1558 = vxor.u32 %v1554, 2147483648
    %v1559 = vmul.f32 %v1558, 1.442695
    %v1560 = vpow.pop %v1559
    %v1561 = vadd.f32 %v1560, 1.0
    %v1562 = vrcp.pop %v1561
    %v1563 = vmul.f32 1.0, %v1562
    %v1564 = vxor.u32 %v1555, 2147483648
    %v1565 = vmul.f32 %v1564, 1.442695
    %v1566 = vpow.pop %v1565
    %v1567 = vadd.f32 %v1566, 1.0
    %v1568 = vrcp.pop %v1567
    %v1569 = vmul.f32 1.0, %v1568
    %v1570 = vtanh.pop %v1556
    %v1571 = vxor.u32 %v1557, 2147483648
    %v1572 = vmul.f32 %v1571, 1.442695
    %v1573 = vpow.pop %v1572
    %v1574 = vadd.f32 %v1573, 1.0
    %v1575 = vrcp.pop %v1574
    %v1576 = vmul.f32 1.0, %v1575
    %v1577 = vmul.f32 %v1569, %v1402
    %v1578 = vmul.f32 %v1563, %v1570
    %v1579 = vadd.f32 %v1577, %v1578
    %v1580 = vtanh.pop %v1579
    %v1581 = vmul.f32 %v1576, %v1580
    %1582 = vst [vmem:[#allocation2] sm:$0xff] %v1581
    %1583 = vst [vmem:[#allocation3] sm:$0xff] %v1579
    // Predicated region
    $region50: #{tpu_custom_call.1} parent=1 // pred_check
      %p1584 = pneg %p92
    $region51: #{tpu_custom_call.1} parent=1 // pred_check_branch
      %1586 = sbr.rel (%p1584) target = $region53
    $region52: #{tpu_custom_call.1} parent=1 // pred_region
      %1587 = vst [vmem:[#allocation14] sm:$0xff] %v1581
      %1588 = vst [vmem:[#allocation16] sm:$0xff] %v1579
      %v1589 = vld [vmem:[#allocation12] sm:$0xff]
      %v1590 = vld [vmem:[#allocation12 + $0x8] sm:$0xff]
      %v1591 = vld [vmem:[#allocation12 + $0x10] sm:$0xff]
      %v1592 = vld [vmem:[#allocation12 + $0x18] sm:$0xff]
      %v1593 = vld [vmem:[#allocation12 + $0x20] sm:$0xff]
      %v1594 = vld [vmem:[#allocation12 + $0x28] sm:$0xff]
      %v1595 = vld [vmem:[#allocation12 + $0x30] sm:$0xff]
      %v1596 = vld [vmem:[#allocation12 + $0x38] sm:$0xff]
      %v1597 = vld [vmem:[#allocation12 + $0x40] sm:$0xff]
      %v1598 = vld [vmem:[#allocation12 + $0x48] sm:$0xff]
      %v1599 = vld [vmem:[#allocation12 + $0x50] sm:$0xff]
      %v1600 = vld [vmem:[#allocation12 + $0x58] sm:$0xff]
      %v1601 = vld [vmem:[#allocation12 + $0x60] sm:$0xff]
      %v1602 = vld [vmem:[#allocation12 + $0x68] sm:$0xff]
      %v1603 = vld [vmem:[#allocation12 + $0x70] sm:$0xff]
      %v1604 = vld [vmem:[#allocation12 + $0x78] sm:$0xff]
      %v1605 = vld [vmem:[%s5] sm:$0x1]
      %v1607 = vlaneseq
      %v1608 = vshrl.u32 %v1607, 7
      %v1609 = vsub.s32 0, %v1608
      %v1610 = vrot.slane %v1605, %v1609
      %1612 = vmatprep.subr.mxu0 0.0
      %1613 = vmatpush1.msra.mxu0 %v1589
      %1614 = vmatprep.subr.mxu0 0.0
      %1615 = vmatpush1.msra.mxu0 %v1590
      %1616 = vmatprep.subr.mxu0 0.0
      %1617 = vmatpush1.msra.mxu0 %v1591
      %1618 = vmatprep.subr.mxu0 0.0
      %1619 = vmatpush1.msra.mxu0 %v1592
      %1620 = vmatprep.subr.mxu0 0.0
      %1621 = vmatpush1.msra.mxu0 %v1593
      %1622 = vmatprep.subr.mxu0 0.0
      %1623 = vmatpush1.msra.mxu0 %v1594
      %1624 = vmatprep.subr.mxu0 0.0
      %1625 = vmatpush1.msra.mxu0 %v1595
      %1626 = vmatprep.subr.mxu0 0.0
      %1627 = vmatpush1.msra.mxu0 %v1596
      %1628 = vmatprep.subr.mxu0 0.0
      %1629 = vmatpush1.msra.mxu0 %v1597
      %1630 = vmatprep.subr.mxu0 0.0
      %1631 = vmatpush1.msra.mxu0 %v1598
      %1632 = vmatprep.subr.mxu0 0.0
      %1633 = vmatpush1.msra.mxu0 %v1599
      %1634 = vmatprep.subr.mxu0 0.0
      %1635 = vmatpush1.msra.mxu0 %v1600
      %1636 = vmatprep.subr.mxu0 0.0
      %1637 = vmatpush1.msra.mxu0 %v1601
      %1638 = vmatprep.subr.mxu0 0.0
      %1639 = vmatpush1.msra.mxu0 %v1602
      %1640 = vmatprep.subr.mxu0 0.0
      %1641 = vmatpush1.msra.mxu0 %v1603
      %1642 = vmatprep.subr.mxu0 0.0
      %1643 = vmatpush1.msra.mxu0 %v1604
      %1644 = vmatprep.subr.mxu0 0.0
      %1645 = vmatpush1.msra.mxu0 0.0
      %1646 = vmatprep.subr.mxu0 0.0
      %1647 = vmatpush1.msra.mxu0 0.0
      %1648 = vmatprep.subr.mxu0 0.0
      %1649 = vmatpush1.msra.mxu0 0.0
      %1650 = vmatprep.subr.mxu0 0.0
      %1651 = vmatpush1.msra.mxu0 0.0
      %1652 = vmatprep.subr.mxu0 0.0
      %1653 = vmatpush1.msra.mxu0 0.0
      %1654 = vmatprep.subr.mxu0 0.0
      %1655 = vmatpush1.msra.mxu0 0.0
      %1656 = vmatprep.subr.mxu0 0.0
      %1657 = vmatpush1.msra.mxu0 0.0
      %1658 = vmatprep.subr.mxu0 0.0
      %1659 = vmatpush1.msra.mxu0 0.0
      %1660 = vmatprep.subr.mxu0 0.0
      %1661 = vmatpush1.msra.mxu0 0.0
      %1662 = vmatprep.subr.mxu0 0.0
      %1663 = vmatpush1.msra.mxu0 0.0
      %1664 = vmatprep.subr.mxu0 0.0
      %1665 = vmatpush1.msra.mxu0 0.0
      %1666 = vmatprep.subr.mxu0 0.0
      %1667 = vmatpush1.msra.mxu0 0.0
      %1668 = vmatprep.subr.mxu0 0.0
      %1669 = vmatpush1.msra.mxu0 0.0
      %1670 = vmatprep.subr.mxu0 0.0
      %1671 = vmatpush1.msra.mxu0 0.0
      %1672 = vmatprep.subr.mxu0 0.0
      %1673 = vmatpush1.msra.mxu0 0.0
      %1674 = vmatprep.subr.mxu0 0.0
      %1675 = vmatpush1.msra.mxu0 0.0
      %1676 = vmatprep.mubr.f32.mxu0 0.0
      %1677 = vmatmul.mubr.f32.gmra.mrb[0].mxu0 %v1581
      %v1678 = vpop.f32.mrb[0].mxu0
      %v1679 = vadd.f32 %v1610, %v1678
      %v1680 = vpop.f32.mrb[0].mxu0
      %1681 = vdwg.mxu0
      %1682 = vst [vmem:[#allocation13] sm:$0xff] %v1679
    $region53: #{tpu_custom_call.1} parent=1 // pred_fallthru
      _
    // Predicated region
    $region54: #{tpu_custom_call.1} parent=1 // pred_check
      _
    $region55: #{tpu_custom_call.1} parent=1 // pred_check_branch
      %1684 = sbr.rel (0) target = $region57
    $region56: #{tpu_custom_call.1} parent=1 // pred_region
      %s1686 = ssub.s32 128, 128
      %1687 = vsyncadd [#allocation6], %s1686
      %s1689 = sshll.u32 [#allocation13], 4
      %s1690 = int_to_ptr.vmem [resolvable:$true] %s1689
      %1692 = dma.vmem_to_hbm [thread:$0]  %s1690, 128, %s6, [#allocation6]
    $region57: #{tpu_custom_call.1} parent=1 // pred_fallthru
      _
    // Predicated region
    $region58: #{tpu_custom_call.1} parent=1 // pred_check
      _
    $region59: #{tpu_custom_call.1} parent=1 // pred_check_branch
      %1694 = sbr.rel (0) target = $region61
    $region60: #{tpu_custom_call.1} parent=1 // pred_region
      %s1696 = ssub.s32 128, 128
      %1697 = vsyncadd [#allocation15], %s1696
      %s1699 = sshll.u32 [#allocation14], 4
      %s1700 = int_to_ptr.vmem [resolvable:$true] %s1699
      %1702 = dma.vmem_to_hbm [thread:$0]  %s1700, 128, %s7, [#allocation15]
    $region61: #{tpu_custom_call.1} parent=1 // pred_fallthru
      _
    // Predicated region
    $region62: #{tpu_custom_call.1} parent=1 // pred_check
      _
    $region63: #{tpu_custom_call.1} parent=1 // pred_check_branch
      %1704 = sbr.rel (0) target = $region65
    $region64: #{tpu_custom_call.1} parent=1 // pred_region
      %s1706 = ssub.s32 128, 128
      %1707 = vsyncadd [#allocation15], %s1706
      %s1709 = sshll.u32 [#allocation16], 4
      %s1710 = int_to_ptr.vmem [resolvable:$true] %s1709
      %1712 = dma.vmem_to_hbm [thread:$0]  %s1710, 128, %s8, [#allocation15]
    $region65: #{tpu_custom_call.1} parent=1 // pred_fallthru
      _
    // Predicated region
    $region66: #{tpu_custom_call.1} parent=1 // pred_check
      _
    $region67: #{tpu_custom_call.1} parent=1 // pred_check_branch
      %1714 = sbr.rel (0) target = $region69
    $region68: #{tpu_custom_call.1} parent=1 // pred_region
      %1715 = dma.done [#allocation6], 128
    $region69: #{tpu_custom_call.1} parent=1 // pred_fallthru
      _
    // Predicated region
    $region70: #{tpu_custom_call.1} parent=1 // pred_check
      _
    $region71: #{tpu_custom_call.1} parent=1 // pred_check_branch
      %1717 = sbr.rel (0) target = $region73
    $region72: #{tpu_custom_call.1} parent=1 // pred_region
      %1718 = dma.done [#allocation15], 128
    $region73: #{tpu_custom_call.1} parent=1 // pred_fallthru
      _
    // Predicated region
    $region74: #{tpu_custom_call.1} parent=1 // pred_check
      _
    $region75: #{tpu_custom_call.1} parent=1 // pred_check_branch
      %1720 = sbr.rel (0) target = $region77
    $region76: #{tpu_custom_call.1} parent=1 // pred_region
      %1721 = dma.done [#allocation15], 128
    $region77: #{tpu_custom_call.1} parent=1 // pred_fallthru
      _
    %1722 = vsyncpa [#allocation5], 1
    %1723 = vsyncpa [#allocation8], 1
    %1724 = vsyncpa [#allocation11], 1
    %1725 = vsyncpa [#allocation6], 1
    %1726 = vsyncpa [#allocation15], 1

</llo_original>
